<compile_context>
chip_gen: v7x
topology: tpu7x:2x2x1
jax: 0.10.0
libtpu: 0.0.40
codegen_flags: <defaults>
</compile_context>

<pallas_src>
import numpy as np
import jax
import jax.numpy as jnp
from jax.experimental import pallas as pl
from jax.experimental.pallas import tpu as pltpu

IOU_GAMMA = 1.0  # stands in for cfg.TRAIN.IoU_Gamma (synthetic constant)


def _round_up(x, m):
    return ((x + m - 1) // m) * m


def _iou_with_target(x, y, w, h, tx1, tx2, ty1, ty2, t_area):
    x1 = x - w * 0.5
    x2 = x + w * 0.5
    y1 = y - h * 0.5
    y2 = y + h * 0.5
    xx1 = jnp.maximum(tx1, x1)
    yy1 = jnp.maximum(ty1, y1)
    xx2 = jnp.minimum(tx2, x2)
    yy2 = jnp.minimum(ty2, y2)
    ww = jnp.maximum(xx2 - xx1, 0.0)
    hh = jnp.maximum(yy2 - yy1, 0.0)
    area = (x2 - x1) * (y2 - y1)
    inter = ww * hh
    return inter / (area + t_area - inter)


def rank_igr_kernel(scal_ref, fb_ref, faT_ref, out_ref):
    bi = pl.program_id(0)      # batch
    ai = pl.program_id(1)      # "a" anchor tile (pair first element)
    bj = pl.program_id(2)      # "b" anchor tile (pair second element) - reduction axis
    ta = faT_ref.shape[1]
    tb = fb_ref.shape[2]

    # ---- per-batch scalars from SMEM: target box + stabilizer c_p ----
    tx = scal_ref[bi, 0]
    ty = scal_ref[bi, 1]
    tw = scal_ref[bi, 2]
    th = scal_ref[bi, 3]
    cp = scal_ref[bi, 4]
    tx1 = tx - tw * 0.5
    tx2 = tx + tw * 0.5
    ty1 = ty - th * 0.5
    ty2 = ty + th * 0.5
    t_area = (tx2 - tx1) * (ty2 - ty1)

    # ---- "b" side, row layout (1, TB): feat rows = [logit1, label, x, y, w, h, 0, 0]
    fb = fb_ref[0]                                   # (8, TB)
    lab_b = fb[1:2]
    pos_b = jnp.where(lab_b > 0.0, 1.0, 0.0)
    p_b = jnp.exp(fb[0:1])                           # pos_prob
    iou_b = _iou_with_target(fb[2:3], fb[3:4], fb[4:5], fb[5:6],
                             tx1, tx2, ty1, ty2, t_area)
    p_b_s = jnp.where(lab_b > 0.0, p_b - cp, 0.0)    # stabilized / masked
    iou_b_s = jnp.where(lab_b > 0.0, iou_b, 0.0)
    u1 = pos_b * jnp.exp(IOU_GAMMA * p_b_s)          # (1, TB)  exp(+g*(p[b]-c))
    u2 = pos_b * jnp.exp(IOU_GAMMA * iou_b_s)        # (1, TB)  exp(+g*iou[b])

    # ---- "a" side, column layout (TA, 1) from the transposed feature view ----
    fa = faT_ref[0]                                  # (TA, 8)
    lab_a = fa[:, 1:2]
    pos_a = jnp.where(lab_a > 0.0, 1.0, 0.0)
    p_a = jnp.exp(fa[:, 0:1])
    iou_a = _iou_with_target(fa[:, 2:3], fa[:, 3:4], fa[:, 4:5], fa[:, 5:6],
                             tx1, tx2, ty1, ty2, t_area)
    p_a_s = jnp.where(lab_a > 0.0, p_a - cp, 0.0)
    iou_a_s = jnp.where(lab_a > 0.0, iou_a, 0.0)
    w1 = pos_a * jnp.exp(-IOU_GAMMA * p_a_s)         # (TA, 1)  exp(-g*(p[a]-c))
    w2 = pos_a * jnp.exp(-IOU_GAMMA * iou_a_s)       # (TA, 1)  exp(-g*iou[a])

    # ---- global anchor indices: stable tie-break + self-pair exclusion ----
    ga = ai * ta + jax.lax.broadcasted_iota(jnp.int32, (ta, tb), 0)
    gb = bj * tb + jax.lax.broadcasted_iota(jnp.int32, (ta, tb), 1)
    lt = ga < gb
    neq = ga != gb

    @pl.when(bj == 0)
    def _():
        out_ref[...] = jnp.zeros_like(out_ref)

    # loss1: pairs ordered by descending IoU; summand exp(-g*(p[a]-p[b]))
    m1 = jnp.where(((iou_a > iou_b) | ((iou_a == iou_b) & lt)) & neq, 1.0, 0.0)
    v1 = jnp.sum(m1 * w1, axis=0, keepdims=True) * u1        # (1, TB)

    # loss2: pairs ordered by descending pos_prob; summand exp(-g*(iou[a]-iou[b]))
    m2 = jnp.where(((p_a > p_b) | ((p_a == p_b) & lt)) & neq, 1.0, 0.0)
    v2 = jnp.sum(m2 * w2, axis=0, keepdims=True) * u2        # (1, TB)

    out_ref[0] = out_ref[0] + jnp.concatenate([v1, v2], axis=0)   # (2, TB)


def rank_igr_loss(cls, label_cls, pred_bboxes, label_target, tile=256):
    """cls: (B, N, 2); label_cls: (B, N); pred_bboxes: (B, 4, N); label_target: (B, 4)."""
    B, N, _ = cls.shape

    # Pairwise tile: 256 default; sweep 512-1024 on v6e (raise vmem_limit_bytes),
    # 256-512 on v5e/v7x.  Clamped so a single tile covers small N.
    tile = max(128, min(tile, _round_up(N, 128)))
    Np = _round_up(N, tile)
    na = Np // tile

    logit1 = cls[:, :, 1].astype(jnp.float32)                    # (B, N)
    lab = label_cls.reshape(B, N).astype(jnp.float32)            # (B, N)
    box = pred_bboxes.astype(jnp.float32)                        # (B, 4, N)

    # per-anchor feature rows: [logit1, label, x, y, w, h, 0, 0]
    feat = jnp.concatenate(
        [logit1[:, None, :], lab[:, None, :], box,
         jnp.zeros((B, 2, N), jnp.float32)], axis=1)             # (B, 8, N)
    pad = Np - N
    if pad:
        pad_blk = jnp.zeros((B, 8, pad), jnp.float32)
        pad_blk = pad_blk.at[:, 1, :].set(-1.0)   # label <= 0 -> never positive
        pad_blk = pad_blk.at[:, 4:6, :].set(1.0)  # nonzero w,h -> finite IoU
        feat = jnp.concatenate([feat, pad_blk], axis=2)          # (B, 8, Np)
    featT = jnp.transpose(feat, (0, 2, 1))                       # (B, Np, 8)

    # per-batch SMEM scalars: target box (x,y,w,h) + c_p = max positive pos_prob
    cp = jnp.exp(jnp.max(jnp.where(lab > 0.0, logit1, -jnp.inf), axis=1))
    cp = jnp.where(jnp.isfinite(cp), cp, 0.0)                    # no positives -> 0
    scal = jnp.concatenate(
        [label_target.astype(jnp.float32), cp[:, None],
         jnp.zeros((B, 3), jnp.float32)], axis=1)                # (B, 8)

    out = pl.pallas_call(
        rank_igr_kernel,
        out_shape=jax.ShapeDtypeStruct((B * na, 2, tile), jnp.float32),
        grid=(B, na, na),
        in_specs=[
            pl.BlockSpec(memory_space=pltpu.MemorySpace.SMEM),            # scal (B, 8)
            pl.BlockSpec((1, 8, tile), lambda bi, ai, bj: (bi, 0, bj)),   # feat, "b" tile
            pl.BlockSpec((1, tile, 8), lambda bi, ai, bj: (bi, ai, 0)),   # featT, "a" tile
        ],
        out_specs=pl.BlockSpec((1, 2, tile),
                               lambda bi, ai, bj: (bi * na + ai, 0, 0)),
        compiler_params=pltpu.CompilerParams(
            dimension_semantics=("parallel", "parallel", "arbitrary")),
    )(scal, feat, featT)

    out = out.reshape(B, na, 2, tile)
    l1s = jnp.sum(out[:, :, 0, :], axis=(1, 2))                  # (B,) pair sums
    l2s = jnp.sum(out[:, :, 1, :], axis=(1, 2))

    npos = jnp.sum((lab > 0.0).astype(jnp.float32), axis=1)      # (B,)
    cnt = npos * (npos - 1.0) * 0.5                              # number of positive pairs
    loss1 = l1s / cnt      # NaN when < 2 positives (mirrors torch empty-pair mean)
    loss2 = l2s / cnt
    valid = (cnt > 0.0) & ~jnp.isnan(loss1) & ~jnp.isnan(loss2)
    nvalid = jnp.sum(valid.astype(jnp.float32))
    final1 = jnp.where(nvalid > 0,
                       jnp.sum(jnp.where(valid, loss1, 0.0)) / jnp.maximum(nvalid, 1.0),
                       0.0)
    final2 = jnp.where(nvalid > 0,
                       jnp.sum(jnp.where(valid, loss2, 0.0)) / jnp.maximum(nvalid, 1.0),
                       0.0)
    return final1, final2


def rank_igr_loss_ref(cls, label_cls, pred_bboxes, label_target, gamma=IOU_GAMMA):
    """Pure-numpy port of the PyTorch forward (loop + sort version)."""
    cls = np.asarray(cls, np.float32)
    label_cls = np.asarray(label_cls, np.float32)
    pred_bboxes = np.asarray(pred_bboxes, np.float32)
    label_target = np.asarray(label_target, np.float32)
    B = cls.shape[0]
    L1, L2 = [], []
    for i in range(B):
        pos = label_cls[i] > 0
        if pos.sum() == 0:
            continue
        p = np.exp(cls[i][pos][:, 1])
        box = pred_bboxes[i][:, pos]
        tgt = label_target[i]
        x1 = box[0] - box[2] / 2; x2 = box[0] + box[2] / 2
        y1 = box[1] - box[3] / 2; y2 = box[1] + box[3] / 2
        tx1 = tgt[0] - tgt[2] / 2; tx2 = tgt[0] + tgt[2] / 2
        ty1 = tgt[1] - tgt[3] / 2; ty2 = tgt[1] + tgt[3] / 2
        xx1 = np.maximum(tx1, x1); yy1 = np.maximum(ty1, y1)
        xx2 = np.minimum(tx2, x2); yy2 = np.minimum(ty2, y2)
        ww = np.clip(xx2 - xx1, 0, None); hh = np.clip(yy2 - yy1, 0, None)
        area = (x2 - x1) * (y2 - y1)
        ta = (tx2 - tx1) * (ty2 - ty1)
        inter = ww * hh
        iou = inter / (area + ta - inter)
        P = iou.shape[0]
        if P < 2:   # empty pair list -> NaN mean -> skipped in torch code
            continue
        order_iou = np.argsort(-iou, kind="stable")
        t1 = [np.exp(-gamma * (p[order_iou[ii]] - p[order_iou[jj]]))
              for ii in range(P - 1) for jj in range(ii + 1, P)]
        loss1 = np.mean(np.asarray(t1, np.float32))
        order_p = np.argsort(-p, kind="stable")
        t2 = [np.exp(-gamma * (iou[order_p[ii]] - iou[order_p[jj]]))
              for ii in range(P - 1) for jj in range(ii + 1, P)]
        loss2 = np.mean(np.asarray(t2, np.float32))
        if np.isnan(loss1) or np.isnan(loss2):
            continue
        L1.append(loss1); L2.append(loss2)
    f1 = float(np.mean(L1)) if L1 else 0.0
    f2 = float(np.mean(L2)) if L2 else 0.0
    return f1, f2


if __name__ == "__main__":
    key = jax.random.PRNGKey(0)
    B, A, H, W = 2, 2, 8, 8
    N = A * H * W  # 128 anchors -> lane-aligned
    k1, k2, k3, k4, k5 = jax.random.split(key, 5)

    cls = jax.random.normal(k1, (B, N, 2), dtype=jnp.float32)
    u = jax.random.uniform(k2, (B, N))
    # labels in {-1, 0, 1}, ~10% positives per image
    label_cls = jnp.where(u < 0.10, 1.0, jnp.where(u < 0.55, 0.0, -1.0)).astype(jnp.float32)
    xy = jax.random.uniform(k3, (B, 2, N), minval=2.0, maxval=8.0)
    wh = jax.random.uniform(k4, (B, 2, N), minval=1.0, maxval=4.0)
    pred_bboxes = jnp.concatenate([xy, wh], axis=1).astype(jnp.float32)
    txy = jax.random.uniform(k5, (B, 2), minval=3.0, maxval=7.0)
    twh = jnp.full((B, 2), 3.0, dtype=jnp.float32)
    label_target = jnp.concatenate([txy, twh], axis=1).astype(jnp.float32)

    f1, f2 = rank_igr_loss(cls, label_cls, pred_bboxes, label_target)
    f1, f2 = jax.block_until_ready((f1, f2))

    r1, r2 = rank_igr_loss_ref(cls, label_cls, pred_bboxes, label_target)
    assert np.allclose(float(f1), r1, rtol=1e-4, atol=1e-5), (float(f1), r1)
    assert np.allclose(float(f2), r2, rtol=1e-4, atol=1e-5), (float(f2), r2)
    print("KERNEL_OK")
</pallas_src>

<mosaic_0001>
module attributes {stable_mosaic.version = 11 : i64} {
  func.func @rank_igr_kernel(%arg0: i32, %arg1: i32, %arg2: i32, %arg3: memref<2x8xf32, #tpu.memory_space<smem>>, %arg4: memref<1x8x128xf32, #tpu.memory_space<vmem>>, %arg5: memref<1x128x8xf32, #tpu.memory_space<vmem>>, %arg6: memref<1x2x128xf32, #tpu.memory_space<vmem>>) attributes {dimension_semantics = [#tpu.dimension_semantics<parallel>, #tpu.dimension_semantics<parallel>, #tpu.dimension_semantics<arbitrary>], iteration_bounds = array<i64: 2, 1, 1>, scalar_prefetch = 0 : i64, scratch_operands = 0 : i64, tpu.core_type = #tpu.core_type<tc>, window_params = [{transform_indices = @transform_0, window_bounds = array<i64: 2, 8>}, {transform_indices = @transform_1, window_bounds = array<i64: 1, 8, 128>}, {transform_indices = @transform_2, window_bounds = array<i64: 1, 128, 8>}, {transform_indices = @transform_3, window_bounds = array<i64: 1, 2, 128>}]} {
    %0 = arith.index_cast %arg0 : i32 to index
    %c0 = arith.constant 0 : index
    %1 = memref.load %arg3[%0, %c0] : memref<2x8xf32, #tpu.memory_space<smem>>
    %2 = arith.index_cast %arg0 : i32 to index
    %c1 = arith.constant 1 : index
    %3 = memref.load %arg3[%2, %c1] : memref<2x8xf32, #tpu.memory_space<smem>>
    %4 = arith.index_cast %arg0 : i32 to index
    %c2 = arith.constant 2 : index
    %5 = memref.load %arg3[%4, %c2] : memref<2x8xf32, #tpu.memory_space<smem>>
    %6 = arith.index_cast %arg0 : i32 to index
    %c3 = arith.constant 3 : index
    %7 = memref.load %arg3[%6, %c3] : memref<2x8xf32, #tpu.memory_space<smem>>
    %8 = arith.index_cast %arg0 : i32 to index
    %c4 = arith.constant 4 : index
    %9 = memref.load %arg3[%8, %c4] : memref<2x8xf32, #tpu.memory_space<smem>>
    %cst = arith.constant 5.000000e-01 : f32
    %10 = arith.mulf %5, %cst : f32
    %11 = arith.subf %1, %10 : f32
    %cst_0 = arith.constant 5.000000e-01 : f32
    %12 = arith.mulf %5, %cst_0 : f32
    %13 = arith.addf %1, %12 : f32
    %cst_1 = arith.constant 5.000000e-01 : f32
    %14 = arith.mulf %7, %cst_1 : f32
    %15 = arith.subf %3, %14 : f32
    %cst_2 = arith.constant 5.000000e-01 : f32
    %16 = arith.mulf %7, %cst_2 : f32
    %17 = arith.addf %3, %16 : f32
    %18 = arith.subf %13, %11 : f32
    %19 = arith.subf %17, %15 : f32
    %20 = arith.mulf %18, %19 : f32
    %c0_3 = arith.constant 0 : index
    %c0_4 = arith.constant 0 : index
    %c0_5 = arith.constant 0 : index
    %21 = vector.load %arg4[%c0_3, %c0_4, %c0_5] : memref<1x8x128xf32, #tpu.memory_space<vmem>>, vector<1x8x128xf32>
    %22 = vector.shape_cast %21 : vector<1x8x128xf32> to vector<8x128xf32>
    %23 = vector.extract_strided_slice %22 {offsets = [1, 0], sizes = [1, 128], strides = [1, 1]} : vector<8x128xf32> to vector<1x128xf32>
    %cst_6 = arith.constant 0.000000e+00 : f32
    %24 = vector.broadcast %cst_6 : f32 to vector<1x128xf32>
    %25 = arith.cmpf ogt, %23, %24 : vector<1x128xf32>
    %cst_7 = arith.constant 1.000000e+00 : f32
    %cst_8 = arith.constant 0.000000e+00 : f32
    %26 = vector.broadcast %cst_7 : f32 to vector<1x128xf32>
    %27 = vector.broadcast %cst_8 : f32 to vector<1x128xf32>
    %28 = arith.select %25, %26, %27 : vector<1x128xi1>, vector<1x128xf32>
    %29 = vector.extract_strided_slice %22 {offsets = [0, 0], sizes = [1, 128], strides = [1, 1]} : vector<8x128xf32> to vector<1x128xf32>
    %30 = math.exp %29 : vector<1x128xf32>
    %31 = vector.extract_strided_slice %22 {offsets = [2, 0], sizes = [1, 128], strides = [1, 1]} : vector<8x128xf32> to vector<1x128xf32>
    %32 = vector.extract_strided_slice %22 {offsets = [3, 0], sizes = [1, 128], strides = [1, 1]} : vector<8x128xf32> to vector<1x128xf32>
    %33 = vector.extract_strided_slice %22 {offsets = [4, 0], sizes = [1, 128], strides = [1, 1]} : vector<8x128xf32> to vector<1x128xf32>
    %34 = vector.extract_strided_slice %22 {offsets = [5, 0], sizes = [1, 128], strides = [1, 1]} : vector<8x128xf32> to vector<1x128xf32>
    %cst_9 = arith.constant 5.000000e-01 : f32
    %35 = vector.broadcast %cst_9 : f32 to vector<1x128xf32>
    %36 = arith.mulf %33, %35 : vector<1x128xf32>
    %37 = arith.subf %31, %36 : vector<1x128xf32>
    %cst_10 = arith.constant 5.000000e-01 : f32
    %38 = vector.broadcast %cst_10 : f32 to vector<1x128xf32>
    %39 = arith.mulf %33, %38 : vector<1x128xf32>
    %40 = arith.addf %31, %39 : vector<1x128xf32>
    %cst_11 = arith.constant 5.000000e-01 : f32
    %41 = vector.broadcast %cst_11 : f32 to vector<1x128xf32>
    %42 = arith.mulf %34, %41 : vector<1x128xf32>
    %43 = arith.subf %32, %42 : vector<1x128xf32>
    %cst_12 = arith.constant 5.000000e-01 : f32
    %44 = vector.broadcast %cst_12 : f32 to vector<1x128xf32>
    %45 = arith.mulf %34, %44 : vector<1x128xf32>
    %46 = arith.addf %32, %45 : vector<1x128xf32>
    %47 = vector.broadcast %11 : f32 to vector<1x128xf32>
    %48 = arith.maximumf %47, %37 : vector<1x128xf32>
    %49 = vector.broadcast %15 : f32 to vector<1x128xf32>
    %50 = arith.maximumf %49, %43 : vector<1x128xf32>
    %51 = vector.broadcast %13 : f32 to vector<1x128xf32>
    %52 = arith.minimumf %51, %40 : vector<1x128xf32>
    %53 = vector.broadcast %17 : f32 to vector<1x128xf32>
    %54 = arith.minimumf %53, %46 : vector<1x128xf32>
    %55 = arith.subf %52, %48 : vector<1x128xf32>
    %cst_13 = arith.constant 0.000000e+00 : f32
    %56 = vector.broadcast %cst_13 : f32 to vector<1x128xf32>
    %57 = arith.maximumf %55, %56 : vector<1x128xf32>
    %58 = arith.subf %54, %50 : vector<1x128xf32>
    %cst_14 = arith.constant 0.000000e+00 : f32
    %59 = vector.broadcast %cst_14 : f32 to vector<1x128xf32>
    %60 = arith.maximumf %58, %59 : vector<1x128xf32>
    %61 = arith.subf %40, %37 : vector<1x128xf32>
    %62 = arith.subf %46, %43 : vector<1x128xf32>
    %63 = arith.mulf %61, %62 : vector<1x128xf32>
    %64 = arith.mulf %57, %60 : vector<1x128xf32>
    %65 = vector.broadcast %20 : f32 to vector<1x128xf32>
    %66 = arith.addf %63, %65 : vector<1x128xf32>
    %67 = arith.subf %66, %64 : vector<1x128xf32>
    %68 = arith.divf %64, %67 : vector<1x128xf32>
    %cst_15 = arith.constant 0.000000e+00 : f32
    %69 = vector.broadcast %cst_15 : f32 to vector<1x128xf32>
    %70 = arith.cmpf ogt, %23, %69 : vector<1x128xf32>
    %71 = vector.broadcast %9 : f32 to vector<1x128xf32>
    %72 = arith.subf %30, %71 : vector<1x128xf32>
    %cst_16 = arith.constant 0.000000e+00 : f32
    %73 = vector.broadcast %cst_16 : f32 to vector<1x128xf32>
    %74 = arith.select %70, %72, %73 : vector<1x128xi1>, vector<1x128xf32>
    %cst_17 = arith.constant 0.000000e+00 : f32
    %75 = vector.broadcast %cst_17 : f32 to vector<1x128xf32>
    %76 = arith.cmpf ogt, %23, %75 : vector<1x128xf32>
    %cst_18 = arith.constant 0.000000e+00 : f32
    %77 = vector.broadcast %cst_18 : f32 to vector<1x128xf32>
    %78 = arith.select %76, %68, %77 : vector<1x128xi1>, vector<1x128xf32>
    %cst_19 = arith.constant 1.000000e+00 : f32
    %79 = vector.broadcast %cst_19 : f32 to vector<1x128xf32>
    %80 = arith.mulf %79, %74 : vector<1x128xf32>
    %81 = math.exp %80 : vector<1x128xf32>
    %82 = arith.mulf %28, %81 : vector<1x128xf32>
    %cst_20 = arith.constant 1.000000e+00 : f32
    %83 = vector.broadcast %cst_20 : f32 to vector<1x128xf32>
    %84 = arith.mulf %83, %78 : vector<1x128xf32>
    %85 = math.exp %84 : vector<1x128xf32>
    %86 = arith.mulf %28, %85 : vector<1x128xf32>
    %c0_21 = arith.constant 0 : index
    %c0_22 = arith.constant 0 : index
    %c0_23 = arith.constant 0 : index
    %87 = vector.load %arg5[%c0_21, %c0_22, %c0_23] : memref<1x128x8xf32, #tpu.memory_space<vmem>>, vector<1x128x8xf32>
    %88 = vector.shape_cast %87 : vector<1x128x8xf32> to vector<128x8xf32>
    %89 = vector.extract_strided_slice %88 {offsets = [0, 1], sizes = [128, 1], strides = [1, 1]} : vector<128x8xf32> to vector<128x1xf32>
    %cst_24 = arith.constant 0.000000e+00 : f32
    %90 = vector.broadcast %cst_24 : f32 to vector<128x1xf32>
    %91 = arith.cmpf ogt, %89, %90 : vector<128x1xf32>
    %cst_25 = arith.constant 1.000000e+00 : f32
    %cst_26 = arith.constant 0.000000e+00 : f32
    %92 = vector.broadcast %cst_25 : f32 to vector<128x1xf32>
    %93 = vector.broadcast %cst_26 : f32 to vector<128x1xf32>
    %94 = arith.select %91, %92, %93 : vector<128x1xi1>, vector<128x1xf32>
    %95 = vector.extract_strided_slice %88 {offsets = [0, 0], sizes = [128, 1], strides = [1, 1]} : vector<128x8xf32> to vector<128x1xf32>
    %96 = math.exp %95 : vector<128x1xf32>
    %97 = vector.extract_strided_slice %88 {offsets = [0, 2], sizes = [128, 1], strides = [1, 1]} : vector<128x8xf32> to vector<128x1xf32>
    %98 = vector.extract_strided_slice %88 {offsets = [0, 3], sizes = [128, 1], strides = [1, 1]} : vector<128x8xf32> to vector<128x1xf32>
    %99 = vector.extract_strided_slice %88 {offsets = [0, 4], sizes = [128, 1], strides = [1, 1]} : vector<128x8xf32> to vector<128x1xf32>
    %100 = vector.extract_strided_slice %88 {offsets = [0, 5], sizes = [128, 1], strides = [1, 1]} : vector<128x8xf32> to vector<128x1xf32>
    %cst_27 = arith.constant 5.000000e-01 : f32
    %101 = vector.broadcast %cst_27 : f32 to vector<128x1xf32>
    %102 = arith.mulf %99, %101 : vector<128x1xf32>
    %103 = arith.subf %97, %102 : vector<128x1xf32>
    %cst_28 = arith.constant 5.000000e-01 : f32
    %104 = vector.broadcast %cst_28 : f32 to vector<128x1xf32>
    %105 = arith.mulf %99, %104 : vector<128x1xf32>
    %106 = arith.addf %97, %105 : vector<128x1xf32>
    %cst_29 = arith.constant 5.000000e-01 : f32
    %107 = vector.broadcast %cst_29 : f32 to vector<128x1xf32>
    %108 = arith.mulf %100, %107 : vector<128x1xf32>
    %109 = arith.subf %98, %108 : vector<128x1xf32>
    %cst_30 = arith.constant 5.000000e-01 : f32
    %110 = vector.broadcast %cst_30 : f32 to vector<128x1xf32>
    %111 = arith.mulf %100, %110 : vector<128x1xf32>
    %112 = arith.addf %98, %111 : vector<128x1xf32>
    %113 = vector.broadcast %11 : f32 to vector<128x1xf32>
    %114 = arith.maximumf %113, %103 : vector<128x1xf32>
    %115 = vector.broadcast %15 : f32 to vector<128x1xf32>
    %116 = arith.maximumf %115, %109 : vector<128x1xf32>
    %117 = vector.broadcast %13 : f32 to vector<128x1xf32>
    %118 = arith.minimumf %117, %106 : vector<128x1xf32>
    %119 = vector.broadcast %17 : f32 to vector<128x1xf32>
    %120 = arith.minimumf %119, %112 : vector<128x1xf32>
    %121 = arith.subf %118, %114 : vector<128x1xf32>
    %cst_31 = arith.constant 0.000000e+00 : f32
    %122 = vector.broadcast %cst_31 : f32 to vector<128x1xf32>
    %123 = arith.maximumf %121, %122 : vector<128x1xf32>
    %124 = arith.subf %120, %116 : vector<128x1xf32>
    %cst_32 = arith.constant 0.000000e+00 : f32
    %125 = vector.broadcast %cst_32 : f32 to vector<128x1xf32>
    %126 = arith.maximumf %124, %125 : vector<128x1xf32>
    %127 = arith.subf %106, %103 : vector<128x1xf32>
    %128 = arith.subf %112, %109 : vector<128x1xf32>
    %129 = arith.mulf %127, %128 : vector<128x1xf32>
    %130 = arith.mulf %123, %126 : vector<128x1xf32>
    %131 = vector.broadcast %20 : f32 to vector<128x1xf32>
    %132 = arith.addf %129, %131 : vector<128x1xf32>
    %133 = arith.subf %132, %130 : vector<128x1xf32>
    %134 = arith.divf %130, %133 : vector<128x1xf32>
    %cst_33 = arith.constant 0.000000e+00 : f32
    %135 = vector.broadcast %cst_33 : f32 to vector<128x1xf32>
    %136 = arith.cmpf ogt, %89, %135 : vector<128x1xf32>
    %137 = vector.broadcast %9 : f32 to vector<128x1xf32>
    %138 = arith.subf %96, %137 : vector<128x1xf32>
    %cst_34 = arith.constant 0.000000e+00 : f32
    %139 = vector.broadcast %cst_34 : f32 to vector<128x1xf32>
    %140 = arith.select %136, %138, %139 : vector<128x1xi1>, vector<128x1xf32>
    %cst_35 = arith.constant 0.000000e+00 : f32
    %141 = vector.broadcast %cst_35 : f32 to vector<128x1xf32>
    %142 = arith.cmpf ogt, %89, %141 : vector<128x1xf32>
    %cst_36 = arith.constant 0.000000e+00 : f32
    %143 = vector.broadcast %cst_36 : f32 to vector<128x1xf32>
    %144 = arith.select %142, %134, %143 : vector<128x1xi1>, vector<128x1xf32>
    %cst_37 = arith.constant -1.000000e+00 : f32
    %145 = vector.broadcast %cst_37 : f32 to vector<128x1xf32>
    %146 = arith.mulf %145, %140 : vector<128x1xf32>
    %147 = math.exp %146 : vector<128x1xf32>
    %148 = arith.mulf %94, %147 : vector<128x1xf32>
    %cst_38 = arith.constant -1.000000e+00 : f32
    %149 = vector.broadcast %cst_38 : f32 to vector<128x1xf32>
    %150 = arith.mulf %149, %144 : vector<128x1xf32>
    %151 = math.exp %150 : vector<128x1xf32>
    %152 = arith.mulf %94, %151 : vector<128x1xf32>
    %c128_i32 = arith.constant 128 : i32
    %153 = arith.muli %arg1, %c128_i32 : i32
    %154 = tpu.iota {dimensions = array<i32: 0>} : vector<128x128xi32>
    %155 = vector.broadcast %153 : i32 to vector<128x128xi32>
    %156 = arith.addi %155, %154 : vector<128x128xi32>
    %c128_i32_39 = arith.constant 128 : i32
    %157 = arith.muli %arg2, %c128_i32_39 : i32
    %158 = tpu.iota {dimensions = array<i32: 1>} : vector<128x128xi32>
    %159 = vector.broadcast %157 : i32 to vector<128x128xi32>
    %160 = arith.addi %159, %158 : vector<128x128xi32>
    %161 = arith.cmpi slt, %156, %160 : vector<128x128xi32>
    %162 = arith.cmpi ne, %156, %160 : vector<128x128xi32>
    %c0_i32 = arith.constant 0 : i32
    %163 = arith.cmpi eq, %arg2, %c0_i32 : i32
    %164 = arith.extui %163 : i1 to i32
    %c0_i32_40 = arith.constant 0 : i32
    %165 = arith.cmpi ne, %164, %c0_i32_40 : i32
    scf.if %165 {
      %cst_53 = arith.constant 0.000000e+00 : f32
      %207 = vector.broadcast %cst_53 : f32 to vector<1x2x128xf32>
      %c0_54 = arith.constant 0 : index
      %c0_55 = arith.constant 0 : index
      %c0_56 = arith.constant 0 : index
      %208 = vector.load %arg6[%c0_54, %c0_55, %c0_56] : memref<1x2x128xf32, #tpu.memory_space<vmem>>, vector<1x2x128xf32>
      tpu.vector_store %arg6[%c0_54, %c0_55, %c0_56], %207 {strides = array<i32>} : memref<1x2x128xf32, #tpu.memory_space<vmem>>, vector<1x2x128xf32>,
    } else {
    }
    %166 = vector.broadcast %134 : vector<128x1xf32> to vector<128x128xf32>
    %167 = vector.broadcast %68 : vector<1x128xf32> to vector<128x128xf32>
    %168 = arith.cmpf ogt, %166, %167 : vector<128x128xf32>
    %169 = vector.broadcast %134 : vector<128x1xf32> to vector<128x128xf32>
    %170 = vector.broadcast %68 : vector<1x128xf32> to vector<128x128xf32>
    %171 = arith.cmpf oeq, %169, %170 : vector<128x128xf32>
    %172 = arith.andi %171, %161 : vector<128x128xi1>
    %173 = arith.ori %168, %172 : vector<128x128xi1>
    %174 = arith.andi %173, %162 : vector<128x128xi1>
    %cst_41 = arith.constant 1.000000e+00 : f32
    %cst_42 = arith.constant 0.000000e+00 : f32
    %175 = vector.broadcast %cst_41 : f32 to vector<128x128xf32>
    %176 = vector.broadcast %cst_42 : f32 to vector<128x128xf32>
    %177 = arith.select %174, %175, %176 : vector<128x128xi1>, vector<128x128xf32>
    %178 = vector.broadcast %148 : vector<128x1xf32> to vector<128x128xf32>
    %179 = arith.mulf %177, %178 : vector<128x128xf32>
    %cst_43 = arith.constant dense<0.000000e+00> : vector<128xf32>
    %180 = vector.multi_reduction <add>, %179, %cst_43 [0] : vector<128x128xf32> to vector<128xf32>
    %181 = vector.shape_cast %180 : vector<128xf32> to vector<1x128xf32>
    %182 = arith.mulf %181, %82 : vector<1x128xf32>
    %183 = vector.broadcast %96 : vector<128x1xf32> to vector<128x128xf32>
    %184 = vector.broadcast %30 : vector<1x128xf32> to vector<128x128xf32>
    %185 = arith.cmpf ogt, %183, %184 : vector<128x128xf32>
    %186 = vector.broadcast %96 : vector<128x1xf32> to vector<128x128xf32>
    %187 = vector.broadcast %30 : vector<1x128xf32> to vector<128x128xf32>
    %188 = arith.cmpf oeq, %186, %187 : vector<128x128xf32>
    %189 = arith.andi %188, %161 : vector<128x128xi1>
    %190 = arith.ori %185, %189 : vector<128x128xi1>
    %191 = arith.andi %190, %162 : vector<128x128xi1>
    %cst_44 = arith.constant 1.000000e+00 : f32
    %cst_45 = arith.constant 0.000000e+00 : f32
    %192 = vector.broadcast %cst_44 : f32 to vector<128x128xf32>
    %193 = vector.broadcast %cst_45 : f32 to vector<128x128xf32>
    %194 = arith.select %191, %192, %193 : vector<128x128xi1>, vector<128x128xf32>
    %195 = vector.broadcast %152 : vector<128x1xf32> to vector<128x128xf32>
    %196 = arith.mulf %194, %195 : vector<128x128xf32>
    %cst_46 = arith.constant dense<0.000000e+00> : vector<128xf32>
    %197 = vector.multi_reduction <add>, %196, %cst_46 [0] : vector<128x128xf32> to vector<128xf32>
    %198 = vector.shape_cast %197 : vector<128xf32> to vector<1x128xf32>
    %199 = arith.mulf %198, %86 : vector<1x128xf32>
    %c0_47 = arith.constant 0 : index
    %c0_48 = arith.constant 0 : index
    %c0_49 = arith.constant 0 : index
    %200 = vector.load %arg6[%c0_47, %c0_48, %c0_49] : memref<1x2x128xf32, #tpu.memory_space<vmem>>, vector<1x2x128xf32>
    %201 = vector.shape_cast %200 : vector<1x2x128xf32> to vector<2x128xf32>
    %202 = tpu.concatenate %182, %199 in 0 : vector<1x128xf32>, vector<1x128xf32> -> vector<2x128xf32>
    %203 = arith.addf %201, %202 : vector<2x128xf32>
    %c0_50 = arith.constant 0 : index
    %c0_51 = arith.constant 0 : index
    %c0_52 = arith.constant 0 : index
    %204 = vector.load %arg6[%c0_50, %c0_51, %c0_52] : memref<1x2x128xf32, #tpu.memory_space<vmem>>, vector<1x2x128xf32>
    %205 = vector.shape_cast %204 : vector<1x2x128xf32> to vector<2x128xf32>
    %206 = vector.shape_cast %203 : vector<2x128xf32> to vector<1x2x128xf32>
    tpu.vector_store %arg6[%c0_50, %c0_51, %c0_52], %206 {strides = array<i32>} : memref<1x2x128xf32, #tpu.memory_space<vmem>>, vector<1x2x128xf32>,
    return
  }
  func.func @transform_0(%arg0: i32, %arg1: i32, %arg2: i32) -> (i32, i32) {
    %c0_i32 = arith.constant 0 : i32
    %c0_i32_0 = arith.constant 0 : i32
    %c0_i32_1 = arith.constant 0 : i32
    return %c0_i32, %c0_i32_0 : i32, i32
  }
  func.func @transform_1(%arg0: i32, %arg1: i32, %arg2: i32) -> (i32, i32, i32) {
    %c0_i32 = arith.constant 0 : i32
    %c0_i32_0 = arith.constant 0 : i32
    return %arg0, %c0_i32, %arg2 : i32, i32, i32
  }
  func.func @transform_2(%arg0: i32, %arg1: i32, %arg2: i32) -> (i32, i32, i32) {
    %c0_i32 = arith.constant 0 : i32
    %c0_i32_0 = arith.constant 0 : i32
    return %arg0, %arg1, %c0_i32 : i32, i32, i32
  }
  func.func @transform_3(%arg0: i32, %arg1: i32, %arg2: i32) -> (i32, i32, i32) {
    %c1_i32 = arith.constant 1 : i32
    %0 = arith.muli %arg0, %c1_i32 : i32
    %1 = arith.addi %0, %arg1 : i32
    %c0_i32 = arith.constant 0 : i32
    %c0_i32_0 = arith.constant 0 : i32
    %c0_i32_1 = arith.constant 0 : i32
    return %1, %c0_i32, %c0_i32_0 : i32, i32, i32
  }
}

</mosaic_0001>

<llo_original>
// kernel: tpu_custom_call.1
$region0: #{tpu_custom_call.1}
  #allocation0 [shape = 'u32[]', space=smem, size = 0x4, offset = 0x4, fixed_abs, tag = 'smem constant byte address 0x4 - core index']
  #allocation1 [shape = 'u32[144,128]{1,0:T(1,128)}', space=vmem, size = 0x12000, scoped, tag = 'internal scratch']
  %s0 = inlined_call_operand.vmem [shape: f32[2,8], index: 0, kind: input, shape index: {}]
  %s1 = inlined_call_operand.vmem [shape: f32[2,8,128], index: 1, kind: input, shape index: {}]
  %s2 = inlined_call_operand.vmem [shape: f32[2,128,8], index: 2, kind: input, shape index: {}]
  %s3 = inlined_call_operand.hbm [shape: f32[2,2,128], index: 3, kind: output, shape index: {}]
  %s4 = sld [smem:[#allocation0]]
  $region53: #{tpu_custom_call.1} parent=0
    _
  %s6 = ssub.s32 1, %s4
  %s7 = scalar_select 0, %s6, %s4
  $region1: #{tpu_custom_call.1} parent=0
    #allocation2 [shape = 'u8[1024]{0}', space=smem, size = 0x400, scoped, tag = 'input window, operand 0, single buffered']
    #allocation3 [shape = 's32[2]{0}', space=sflag, size = 0x8, scoped, tag = 'scoped memory for tpu_custom_call.1']
    #allocation4 [shape = 's32[2]{0}', space=sflag, size = 0x8, scoped, tag = 'scoped memory for tpu_custom_call.1']
    #allocation5 [shape = 'u8[2048]{0}', space=vmem, size = 0x800, scoped, tag = 'output window, operand 0']
    %8 = vsyncpa [#allocation4], 0
    %9 = vsyncpa [#allocation3], 0
    %s10 = scalar_lea.sflag [#allocation3], 1
    %11 = vsyncpa %s10, 0
    loop: start=0, step=1, limit=4
    $region2: #{tpu_custom_call.1} parent=1 // loop_pre_header
      _
    $region3: #{tpu_custom_call.1} parent=1 // loop_header
      %s13 = sphi 0, %s17
      %p14 = scmp.ge.s32.totalorder %s13, 4
      %s20 = sphi 0, %s39
      %s21 = sphi 0, %s35
      %s22 = sphi 0, %s31
      %s23 = sphi 0, %s20
      %s24 = sphi 0, %s21
      %s25 = sphi 0, %s22
      %s26 = sphi 0, %s23
      %s27 = sphi 0, %s24
      %s28 = sphi 0, %s25
      %s40 = sphi 0, %s40
      %s42 = sphi 0, %s40
      %s43 = sphi 0, %s42
      %s57 = sphi 0, %s43
      %s65 = sphi 0, %s67
      %s68 = sphi 0, %s65
      %s69 = sphi 0, %s68
      %s85 = sphi 0, %s69
      %s93 = sphi 0, %s95
      %s96 = sphi 0, %s93
      %s97 = sphi 0, %s96
      %s113 = sphi 0, %s97
      %s121 = sphi 0, %s123
      %s124 = sphi 0, %s121
      %s125 = sphi 0, %s124
      %s141 = sphi 0, %s125
    $region4: #{tpu_custom_call.1} parent=1 // loop_header_branch
      %16 = sbr.rel (%p14) target = $region8
    $region5: #{tpu_custom_call.1} parent=1 // loop_body
      %s18 = ssub.s32 %s13, 1
      %s19 = ssub.s32 %s13, 2
      %s29 = sadd.s32 1, %s22
      %p30 = scmp.ge.s32.totalorder %s29, 1
      %s31 = scalar_select %p30, 0, %s29
      %s32 = sadd.s32 1, %s21
      %s33 = scalar_select %p30, %s32, %s21
      %p34 = scmp.ge.s32.totalorder %s33, 1
      %s35 = scalar_select %p34, 0, %s33
      %s36 = sadd.s32 1, %s20
      %s37 = scalar_select %p34, %s36, %s20
      %p38 = scmp.ge.s32.totalorder %s37, 2
      %s39 = scalar_select %p38, 0, %s37
      %s41 = sadd.s32 %s40, 1
      %p44 = scmp.eq.s32.totalorder %s13, 1
      %p45 = scmp.ne.s32.totalorder %s40, %s42
      %p46 = scmp.eq.s32.totalorder %s13, 0
      %p47 = por %p45, %p46
      %p48 = scmp.ne.s32.totalorder %s40, %s42
      %p49 = scmp.eq.s32.totalorder %s18, 1
      %p50 = por %p48, %p49
      %p51 = scmp.ne.s32.totalorder %s42, %s43
      %p52 = scmp.eq.s32.totalorder %s18, 0
      %p53 = por %p51, %p52
      %p54 = scmp.ne.s32.totalorder %s42, %s43
      %p55 = scmp.eq.s32.totalorder %s19, 1
      %p56 = por %p54, %p55
      %p58 = scmp.ne.s32.totalorder %s43, %s57
      %p59 = scmp.eq.s32.totalorder %s19, 0
      %p60 = por %p58, %p59
      %s61 = ssub.s32 %s20, %s39
      %s62 = ssub.s32 %s22, %s31
      %s63 = sor.u32 %s61, %s62
      %p64 = scmp.eq.s32.totalorder %s63, 0
      %s66 = sadd.s32 %s65, 1
      %s67 = scalar_select %p64, %s65, %s66
      %p70 = pneg %p64
      %p71 = scmp.eq.s32.totalorder %s13, 1
      %p72 = por %p70, %p71
      %p73 = scmp.ne.s32.totalorder %s65, %s68
      %p74 = scmp.eq.s32.totalorder %s13, 0
      %p75 = por %p73, %p74
      %p76 = scmp.ne.s32.totalorder %s65, %s68
      %p77 = scmp.eq.s32.totalorder %s18, 1
      %p78 = por %p76, %p77
      %p79 = scmp.ne.s32.totalorder %s68, %s69
      %p80 = scmp.eq.s32.totalorder %s18, 0
      %p81 = por %p79, %p80
      %p82 = scmp.ne.s32.totalorder %s68, %s69
      %p83 = scmp.eq.s32.totalorder %s19, 1
      %p84 = por %p82, %p83
      %p86 = scmp.ne.s32.totalorder %s69, %s85
      %p87 = scmp.eq.s32.totalorder %s19, 0
      %p88 = por %p86, %p87
      %s89 = ssub.s32 %s20, %s39
      %s90 = ssub.s32 %s21, %s35
      %s91 = sor.u32 %s89, %s90
      %p92 = scmp.eq.s32.totalorder %s91, 0
      %s94 = sadd.s32 %s93, 1
      %s95 = scalar_select %p92, %s93, %s94
      %p98 = pneg %p92
      %p99 = scmp.eq.s32.totalorder %s13, 1
      %p100 = por %p98, %p99
      %p101 = scmp.ne.s32.totalorder %s93, %s96
      %p102 = scmp.eq.s32.totalorder %s13, 0
      %p103 = por %p101, %p102
      %p104 = scmp.ne.s32.totalorder %s93, %s96
      %p105 = scmp.eq.s32.totalorder %s18, 1
      %p106 = por %p104, %p105
      %p107 = scmp.ne.s32.totalorder %s96, %s97
      %p108 = scmp.eq.s32.totalorder %s18, 0
      %p109 = por %p107, %p108
      %p110 = scmp.ne.s32.totalorder %s96, %s97
      %p111 = scmp.eq.s32.totalorder %s19, 1
      %p112 = por %p110, %p111
      %p114 = scmp.ne.s32.totalorder %s97, %s113
      %p115 = scmp.eq.s32.totalorder %s19, 0
      %p116 = por %p114, %p115
      %s117 = sadd.s32 %s20, %s21
      %s118 = sadd.s32 %s39, %s35
      %s119 = ssub.s32 %s117, %s118
      %p120 = scmp.eq.s32.totalorder %s119, 0
      %s122 = sadd.s32 %s121, 1
      %s123 = scalar_select %p120, %s121, %s122
      %p126 = pneg %p120
      %p127 = scmp.eq.s32.totalorder %s13, 1
      %p128 = por %p126, %p127
      %p129 = scmp.ne.s32.totalorder %s121, %s124
      %p130 = scmp.eq.s32.totalorder %s13, 0
      %p131 = por %p129, %p130
      %p132 = scmp.ne.s32.totalorder %s121, %s124
      %p133 = scmp.eq.s32.totalorder %s18, 1
      %p134 = por %p132, %p133
      %p135 = scmp.ne.s32.totalorder %s124, %s125
      %p136 = scmp.eq.s32.totalorder %s18, 0
      %p137 = por %p135, %p136
      %p138 = scmp.ne.s32.totalorder %s124, %s125
      %p139 = scmp.eq.s32.totalorder %s19, 1
      %p140 = por %p138, %p139
      %p142 = scmp.ne.s32.totalorder %s125, %s141
      %p143 = scmp.eq.s32.totalorder %s19, 0
      %p144 = por %p142, %p143
      %p145 = scmp.le.s32.totalorder 1, %s13
      %p146 = scmp.lt.s32.totalorder %s13, 3
      %p147 = pnand %p145, %p146
      %p148 = pneg %p147
      // Predicated region
      $region9: #{tpu_custom_call.1} parent=5 // pred_check
        _
      $region10: #{tpu_custom_call.1} parent=5 // pred_check_branch
        %150 = sbr.rel (%p147) target = $region12
      $region11: #{tpu_custom_call.1} parent=5 // pred_region
        %s151 = ssub.s32 %s13, 1
        // Predicated region
        $region13: #{tpu_custom_call.1} parent=11 // pred_check
          %p152 = pneg %p53
        $region14: #{tpu_custom_call.1} parent=11 // pred_check_branch
          %154 = sbr.rel (%p152) target = $region16
        $region15: #{tpu_custom_call.1} parent=11 // pred_region
          %s156 = ssub.s32 32, 32
          %157 = vsyncadd [#allocation4], %s156
          %s159 = sshll.u32 %s0, 4
          %s160 = int_to_ptr.vmem [resolvable:$true] %s159
          %162 = dma.vmem_to_smem %s160, 32, [#allocation2], [#allocation4]
        $region16: #{tpu_custom_call.1} parent=11 // pred_fallthru
          _
      $region12: #{tpu_custom_call.1} parent=5 // pred_fallthru
        _
      %p163 = scmp.lt.s32.totalorder %s13, 2
      // Predicated region
      $region17: #{tpu_custom_call.1} parent=5 // pred_check
        %p164 = pneg %p163
      $region18: #{tpu_custom_call.1} parent=5 // pred_check_branch
        %166 = sbr.rel (%p164) target = $region20
      $region19: #{tpu_custom_call.1} parent=5 // pred_region
        // Predicated region
        $region21: #{tpu_custom_call.1} parent=19 // pred_check
          %p167 = pneg %p75
        $region22: #{tpu_custom_call.1} parent=19 // pred_check_branch
          %169 = sbr.rel (%p167) target = $region24
        $region23: #{tpu_custom_call.1} parent=19 // pred_region
          %p170 = scmp.lt.s32.totalorder %s20, 1
          %s171 = scalar_select %p170, %s20, 1
          %p172 = scmp.lt.s32.totalorder %s22, 0
          %s173 = scalar_select %p172, %s22, 0
          %s174 = sadd.s32 %s173, %s171
          %s175 = smul.addr %s174, 8
          %s176 = scalar_lea.vmem %s1, %s175
        $region24: #{tpu_custom_call.1} parent=19 // pred_fallthru
          _
        // Predicated region
        $region25: #{tpu_custom_call.1} parent=19 // pred_check
          %p177 = pneg %p103
        $region26: #{tpu_custom_call.1} parent=19 // pred_check_branch
          %179 = sbr.rel (%p177) target = $region28
        $region27: #{tpu_custom_call.1} parent=19 // pred_region
          %s180 = smul.u32 16, %s21
          %p181 = scmp.lt.s32.totalorder %s20, 1
          %s182 = scalar_select %p181, %s20, 1
          %p183 = scmp.lt.s32.totalorder %s180, 15
          %s184 = scalar_select %p183, %s180, 15
          %s185 = smul.addr %s182, 16
          %s186 = sadd.s32 %s184, %s185
          %s187 = smul.addr %s186, 8
          %s188 = scalar_lea.vmem %s2, %s187
          %s189 = smul.u32 16, %s21
        $region28: #{tpu_custom_call.1} parent=19 // pred_fallthru
          _
      $region20: #{tpu_custom_call.1} parent=5 // pred_fallthru
        _
      %p190 = scmp.le.s32.totalorder 1, %s13
      %p191 = scmp.lt.s32.totalorder %s13, 3
      %p192 = pnand %p190, %p191
      %p193 = pneg %p192
      // Predicated region
      $region29: #{tpu_custom_call.1} parent=5 // pred_check
        _
      $region30: #{tpu_custom_call.1} parent=5 // pred_check_branch
        %195 = sbr.rel (%p192) target = $region32
      $region31: #{tpu_custom_call.1} parent=5 // pred_region
        %s196 = ssub.s32 %s13, 1
        // Predicated region
        $region33: #{tpu_custom_call.1} parent=31 // pred_check
          %p197 = pneg %p53
        $region34: #{tpu_custom_call.1} parent=31 // pred_check_branch
          %199 = sbr.rel (%p197) target = $region36
        $region35: #{tpu_custom_call.1} parent=31 // pred_region
          %200 = dma.done [#allocation4], 32
        $region36: #{tpu_custom_call.1} parent=31 // pred_fallthru
          _
        %201 = sfence
        %p202 = pneg %p53
        %p203 = pneg %p50
        %p204 = scmp.lt.s32.totalorder %s23, 1
        %s205 = scalar_select %p204, %s23, 1
        %p206 = scmp.lt.s32.totalorder %s25, 0
        %s207 = scalar_select %p206, %s25, 0
        %s208 = sadd.s32 %s207, %s205
        %s209 = smul.addr %s208, 8
        %s210 = scalar_lea.vmem %s1, %s209
        %p211 = pneg %p81
        %p212 = pneg %p78
        %s213 = smul.u32 16, %s24
        %p214 = scmp.lt.s32.totalorder %s23, 1
        %s215 = scalar_select %p214, %s23, 1
        %p216 = scmp.lt.s32.totalorder %s213, 15
        %s217 = scalar_select %p216, %s213, 15
        %s218 = smul.addr %s215, 16
        %s219 = sadd.s32 %s217, %s218
        %s220 = smul.addr %s219, 8
        %s221 = scalar_lea.vmem %s2, %s220
        %p222 = pneg %p109
        %p223 = pneg %p106
        %p224 = pneg %p137
        %p225 = pneg %p134
        %s226 = sand.u32 %s124, 1
        %s227 = scalar_lea.sflag [#allocation3], %s226
        %s228 = sand.u32 %s124, 1
        %s229 = smul.addr %s228, 2
        %s230 = scalar_lea.vmem [#allocation5], %s229
        %p231 = scmp.lt.s32.totalorder %s23, 1
        %s232 = scalar_select %p231, %s23, 1
        %p233 = scmp.lt.s32.totalorder %s25, 0
        %s234 = scalar_select %p233, %s25, 0
        %s235 = sadd.s32 %s234, %s232
        %s236 = smul.addr %s235, 8
        %s237 = scalar_lea.vmem %s1, %s236
        %s238 = smul.u32 16, %s24
        %p239 = scmp.lt.s32.totalorder %s23, 1
        %s240 = scalar_select %p239, %s23, 1
        %p241 = scmp.lt.s32.totalorder %s238, 15
        %s242 = scalar_select %p241, %s238, 15
        %s243 = smul.addr %s240, 16
        %s244 = sadd.s32 %s242, %s243
        %s245 = smul.addr %s244, 8
        %s246 = scalar_lea.vmem %s2, %s245
        %s247 = smul.u32 16, %s24
        %s248 = sadd.s32 %s23, %s24
        %s249 = smul.u32 %s23, 128
        %s250 = sld [smem:[#allocation2 + %s249]]
        %s251 = sadd.s32 %s249, 1
        %s252 = sld [smem:[#allocation2 + %s251]]
        %s253 = sadd.s32 %s249, 2
        %s254 = sld [smem:[#allocation2 + %s253]]
        %s255 = sadd.s32 %s249, 3
        %s256 = sld [smem:[#allocation2 + %s255]]
        %s257 = sadd.s32 %s249, 4
        %s258 = sld [smem:[#allocation2 + %s257]]
        %s259 = smul.f32 %s254, 0.5
        %s260 = ssub.f32 %s250, %s259
        %s261 = sadd.f32 %s250, %s259
        %s262 = smul.f32 %s256, 0.5
        %s263 = ssub.f32 %s252, %s262
        %s264 = sadd.f32 %s252, %s262
        %s265 = ssub.f32 %s261, %s260
        %s266 = ssub.f32 %s264, %s263
        %s267 = smul.f32 %s265, %s266
        %v268 = vld [vmem:[%s237] sm:$0xff]
        %vm269 = vcmp.gt.f32.partialorder %v268, 0.0
        %v270 = vsel %vm269, 1.0, 0.0
        %v271 = vmul.f32 %v268, 1.442695
        %v272 = vpow.pop %v271
        %v273 = vmul.f32 %v268, 0.5
        %v275 = vrot.slane %v273, 2
        %v277 = vsub.f32 %v268, %v275
        %v278 = vadd.f32 %v268, %v275
        %v279 = vstv %s260
        %v280 = vmax.f32 %v279, %v277
        %v281 = vstv %s263
        %v282 = vmax.f32 %v281, %v277
        %v283 = vstv %s261
        %v284 = vmin.f32 %v283, %v278
        %v285 = vstv %s264
        %v286 = vmin.f32 %v285, %v278
        %v287 = vsub.f32 %v284, %v280
        %v288 = vmax.f32 %v287, 0.0
        %v289 = vsub.f32 %v286, %v282
        %v290 = vmax.f32 %v289, 0.0
        %v291 = vsub.f32 %v278, %v277
        %v293 = vrot.slane %v291, 1
        %v295 = vmul.f32 %v291, %v293
        %v297 = vrot.slane %v290, 1
        %v299 = vmul.f32 %v288, %v297
        %v300 = vstv %s267
        %v301 = vadd.f32 %v295, %v300
        %v302 = vsub.f32 %v301, %v299
        %v303 = vrcp.pop %v302
        %v304 = vmul.f32 %v299, %v303
        %v305 = vstv %s258
        %v306 = vsub.f32 %v272, %v305
        %v308 = vrot.slane %v306, 7
        %v310 = vsel %vm269, %v308, 0.0
        %v312 = vrot.slane %v304, 1
        %v314 = vsel %vm269, %v312, 0.0
        %v315 = vmul.f32 %v310, 1.442695
        %v316 = vpow.pop %v315
        %v317 = vmul.f32 %v270, %v316
        %v318 = vmul.f32 %v314, 1.442695
        %v319 = vpow.pop %v318
        %v320 = vmul.f32 %v270, %v319
        %v321 = vld [vmem:[%s246] sm:$0xff]
        %v322 = vld [vmem:[%s246 + $0x8] sm:$0xff]
        %v323 = vld [vmem:[%s246 + $0x10] sm:$0xff]
        %v324 = vld [vmem:[%s246 + $0x18] sm:$0xff]
        %v325 = vld [vmem:[%s246 + $0x20] sm:$0xff]
        %v326 = vld [vmem:[%s246 + $0x28] sm:$0xff]
        %v327 = vld [vmem:[%s246 + $0x30] sm:$0xff]
        %v328 = vld [vmem:[%s246 + $0x38] sm:$0xff]
        %v329 = vld [vmem:[%s246 + $0x40] sm:$0xff]
        %v330 = vld [vmem:[%s246 + $0x48] sm:$0xff]
        %v331 = vld [vmem:[%s246 + $0x50] sm:$0xff]
        %v332 = vld [vmem:[%s246 + $0x58] sm:$0xff]
        %v333 = vld [vmem:[%s246 + $0x60] sm:$0xff]
        %v334 = vld [vmem:[%s246 + $0x68] sm:$0xff]
        %v335 = vld [vmem:[%s246 + $0x70] sm:$0xff]
        %v336 = vld [vmem:[%s246 + $0x78] sm:$0xff]
        %vm337 = vcmp.gt.f32.partialorder %v321, 0.0
        %vm338 = vcmp.gt.f32.partialorder %v322, 0.0
        %vm339 = vcmp.gt.f32.partialorder %v323, 0.0
        %vm340 = vcmp.gt.f32.partialorder %v324, 0.0
        %vm341 = vcmp.gt.f32.partialorder %v325, 0.0
        %vm342 = vcmp.gt.f32.partialorder %v326, 0.0
        %vm343 = vcmp.gt.f32.partialorder %v327, 0.0
        %vm344 = vcmp.gt.f32.partialorder %v328, 0.0
        %vm345 = vcmp.gt.f32.partialorder %v329, 0.0
        %vm346 = vcmp.gt.f32.partialorder %v330, 0.0
        %vm347 = vcmp.gt.f32.partialorder %v331, 0.0
        %vm348 = vcmp.gt.f32.partialorder %v332, 0.0
        %vm349 = vcmp.gt.f32.partialorder %v333, 0.0
        %vm350 = vcmp.gt.f32.partialorder %v334, 0.0
        %vm351 = vcmp.gt.f32.partialorder %v335, 0.0
        %vm352 = vcmp.gt.f32.partialorder %v336, 0.0
        %v353 = vsel %vm337, 1.0, 0.0
        %v354 = vsel %vm338, 1.0, 0.0
        %v355 = vsel %vm339, 1.0, 0.0
        %v356 = vsel %vm340, 1.0, 0.0
        %v357 = vsel %vm341, 1.0, 0.0
        %v358 = vsel %vm342, 1.0, 0.0
        %v359 = vsel %vm343, 1.0, 0.0
        %v360 = vsel %vm344, 1.0, 0.0
        %v361 = vsel %vm345, 1.0, 0.0
        %v362 = vsel %vm346, 1.0, 0.0
        %v363 = vsel %vm347, 1.0, 0.0
        %v364 = vsel %vm348, 1.0, 0.0
        %v365 = vsel %vm349, 1.0, 0.0
        %v366 = vsel %vm350, 1.0, 0.0
        %v367 = vsel %vm351, 1.0, 0.0
        %v368 = vsel %vm352, 1.0, 0.0
        %v369 = vmul.f32 %v321, 1.442695
        %v370 = vpow.pop %v369
        %v371 = vmul.f32 %v322, 1.442695
        %v372 = vpow.pop %v371
        %v373 = vmul.f32 %v323, 1.442695
        %v374 = vpow.pop %v373
        %v375 = vmul.f32 %v324, 1.442695
        %v376 = vpow.pop %v375
        %v377 = vmul.f32 %v325, 1.442695
        %v378 = vpow.pop %v377
        %v379 = vmul.f32 %v326, 1.442695
        %v380 = vpow.pop %v379
        %v381 = vmul.f32 %v327, 1.442695
        %v382 = vpow.pop %v381
        %v383 = vmul.f32 %v328, 1.442695
        %v384 = vpow.pop %v383
        %v385 = vmul.f32 %v329, 1.442695
        %v386 = vpow.pop %v385
        %v387 = vmul.f32 %v330, 1.442695
        %v388 = vpow.pop %v387
        %v389 = vmul.f32 %v331, 1.442695
        %v390 = vpow.pop %v389
        %v391 = vmul.f32 %v332, 1.442695
        %v392 = vpow.pop %v391
        %v393 = vmul.f32 %v333, 1.442695
        %v394 = vpow.pop %v393
        %v395 = vmul.f32 %v334, 1.442695
        %v396 = vpow.pop %v395
        %v397 = vmul.f32 %v335, 1.442695
        %v398 = vpow.pop %v397
        %v399 = vmul.f32 %v336, 1.442695
        %v400 = vpow.pop %v399
        %v401 = vmul.f32 %v321, 0.5
        %v402 = vmul.f32 %v322, 0.5
        %v403 = vmul.f32 %v323, 0.5
        %v404 = vmul.f32 %v324, 0.5
        %v405 = vmul.f32 %v325, 0.5
        %v406 = vmul.f32 %v326, 0.5
        %v407 = vmul.f32 %v327, 0.5
        %v408 = vmul.f32 %v328, 0.5
        %v409 = vmul.f32 %v329, 0.5
        %v410 = vmul.f32 %v330, 0.5
        %v411 = vmul.f32 %v331, 0.5
        %v412 = vmul.f32 %v332, 0.5
        %v413 = vmul.f32 %v333, 0.5
        %v414 = vmul.f32 %v334, 0.5
        %v415 = vmul.f32 %v335, 0.5
        %v416 = vmul.f32 %v336, 0.5
        %433 = vrot.lane.b32.xlu0 %v401, 126
        %v434 = vpop.permute.xlu0 %433
        %435 = vrot.lane.b32.xlu0 %v402, 126
        %v436 = vpop.permute.xlu0 %435
        %437 = vrot.lane.b32.xlu0 %v403, 126
        %v438 = vpop.permute.xlu0 %437
        %439 = vrot.lane.b32.xlu0 %v404, 126
        %v440 = vpop.permute.xlu0 %439
        %441 = vrot.lane.b32.xlu0 %v405, 126
        %v442 = vpop.permute.xlu0 %441
        %443 = vrot.lane.b32.xlu0 %v406, 126
        %v444 = vpop.permute.xlu0 %443
        %445 = vrot.lane.b32.xlu0 %v407, 126
        %v446 = vpop.permute.xlu0 %445
        %447 = vrot.lane.b32.xlu0 %v408, 126
        %v448 = vpop.permute.xlu0 %447
        %449 = vrot.lane.b32.xlu0 %v409, 126
        %v450 = vpop.permute.xlu0 %449
        %451 = vrot.lane.b32.xlu0 %v410, 126
        %v452 = vpop.permute.xlu0 %451
        %453 = vrot.lane.b32.xlu0 %v411, 126
        %v454 = vpop.permute.xlu0 %453
        %455 = vrot.lane.b32.xlu0 %v412, 126
        %v456 = vpop.permute.xlu0 %455
        %457 = vrot.lane.b32.xlu0 %v413, 126
        %v458 = vpop.permute.xlu0 %457
        %459 = vrot.lane.b32.xlu0 %v414, 126
        %v460 = vpop.permute.xlu0 %459
        %461 = vrot.lane.b32.xlu0 %v415, 126
        %v462 = vpop.permute.xlu0 %461
        %463 = vrot.lane.b32.xlu0 %v416, 126
        %v464 = vpop.permute.xlu0 %463
        %v481 = vsub.f32 %v321, %v434
        %v482 = vsub.f32 %v322, %v436
        %v483 = vsub.f32 %v323, %v438
        %v484 = vsub.f32 %v324, %v440
        %v485 = vsub.f32 %v325, %v442
        %v486 = vsub.f32 %v326, %v444
        %v487 = vsub.f32 %v327, %v446
        %v488 = vsub.f32 %v328, %v448
        %v489 = vsub.f32 %v329, %v450
        %v490 = vsub.f32 %v330, %v452
        %v491 = vsub.f32 %v331, %v454
        %v492 = vsub.f32 %v332, %v456
        %v493 = vsub.f32 %v333, %v458
        %v494 = vsub.f32 %v334, %v460
        %v495 = vsub.f32 %v335, %v462
        %v496 = vsub.f32 %v336, %v464
        %v497 = vadd.f32 %v321, %v434
        %v498 = vadd.f32 %v322, %v436
        %v499 = vadd.f32 %v323, %v438
        %v500 = vadd.f32 %v324, %v440
        %v501 = vadd.f32 %v325, %v442
        %v502 = vadd.f32 %v326, %v444
        %v503 = vadd.f32 %v327, %v446
        %v504 = vadd.f32 %v328, %v448
        %v505 = vadd.f32 %v329, %v450
        %v506 = vadd.f32 %v330, %v452
        %v507 = vadd.f32 %v331, %v454
        %v508 = vadd.f32 %v332, %v456
        %v509 = vadd.f32 %v333, %v458
        %v510 = vadd.f32 %v334, %v460
        %v511 = vadd.f32 %v335, %v462
        %v512 = vadd.f32 %v336, %v464
        %v513 = vmax.f32 %v279, %v481
        %v514 = vmax.f32 %v279, %v482
        %v515 = vmax.f32 %v279, %v483
        %v516 = vmax.f32 %v279, %v484
        %v517 = vmax.f32 %v279, %v485
        %v518 = vmax.f32 %v279, %v486
        %v519 = vmax.f32 %v279, %v487
        %v520 = vmax.f32 %v279, %v488
        %v521 = vmax.f32 %v279, %v489
        %v522 = vmax.f32 %v279, %v490
        %v523 = vmax.f32 %v279, %v491
        %v524 = vmax.f32 %v279, %v492
        %v525 = vmax.f32 %v279, %v493
        %v526 = vmax.f32 %v279, %v494
        %v527 = vmax.f32 %v279, %v495
        %v528 = vmax.f32 %v279, %v496
        %v529 = vmax.f32 %v281, %v481
        %v530 = vmax.f32 %v281, %v482
        %v531 = vmax.f32 %v281, %v483
        %v532 = vmax.f32 %v281, %v484
        %v533 = vmax.f32 %v281, %v485
        %v534 = vmax.f32 %v281, %v486
        %v535 = vmax.f32 %v281, %v487
        %v536 = vmax.f32 %v281, %v488
        %v537 = vmax.f32 %v281, %v489
        %v538 = vmax.f32 %v281, %v490
        %v539 = vmax.f32 %v281, %v491
        %v540 = vmax.f32 %v281, %v492
        %v541 = vmax.f32 %v281, %v493
        %v542 = vmax.f32 %v281, %v494
        %v543 = vmax.f32 %v281, %v495
        %v544 = vmax.f32 %v281, %v496
        %v545 = vmin.f32 %v283, %v497
        %v546 = vmin.f32 %v283, %v498
        %v547 = vmin.f32 %v283, %v499
        %v548 = vmin.f32 %v283, %v500
        %v549 = vmin.f32 %v283, %v501
        %v550 = vmin.f32 %v283, %v502
        %v551 = vmin.f32 %v283, %v503
        %v552 = vmin.f32 %v283, %v504
        %v553 = vmin.f32 %v283, %v505
        %v554 = vmin.f32 %v283, %v506
        %v555 = vmin.f32 %v283, %v507
        %v556 = vmin.f32 %v283, %v508
        %v557 = vmin.f32 %v283, %v509
        %v558 = vmin.f32 %v283, %v510
        %v559 = vmin.f32 %v283, %v511
        %v560 = vmin.f32 %v283, %v512
        %v561 = vmin.f32 %v285, %v497
        %v562 = vmin.f32 %v285, %v498
        %v563 = vmin.f32 %v285, %v499
        %v564 = vmin.f32 %v285, %v500
        %v565 = vmin.f32 %v285, %v501
        %v566 = vmin.f32 %v285, %v502
        %v567 = vmin.f32 %v285, %v503
        %v568 = vmin.f32 %v285, %v504
        %v569 = vmin.f32 %v285, %v505
        %v570 = vmin.f32 %v285, %v506
        %v571 = vmin.f32 %v285, %v507
        %v572 = vmin.f32 %v285, %v508
        %v573 = vmin.f32 %v285, %v509
        %v574 = vmin.f32 %v285, %v510
        %v575 = vmin.f32 %v285, %v511
        %v576 = vmin.f32 %v285, %v512
        %v577 = vsub.f32 %v545, %v513
        %v578 = vsub.f32 %v546, %v514
        %v579 = vsub.f32 %v547, %v515
        %v580 = vsub.f32 %v548, %v516
        %v581 = vsub.f32 %v549, %v517
        %v582 = vsub.f32 %v550, %v518
        %v583 = vsub.f32 %v551, %v519
        %v584 = vsub.f32 %v552, %v520
        %v585 = vsub.f32 %v553, %v521
        %v586 = vsub.f32 %v554, %v522
        %v587 = vsub.f32 %v555, %v523
        %v588 = vsub.f32 %v556, %v524
        %v589 = vsub.f32 %v557, %v525
        %v590 = vsub.f32 %v558, %v526
        %v591 = vsub.f32 %v559, %v527
        %v592 = vsub.f32 %v560, %v528
        %v593 = vmax.f32 %v577, 0.0
        %v594 = vmax.f32 %v578, 0.0
        %v595 = vmax.f32 %v579, 0.0
        %v596 = vmax.f32 %v580, 0.0
        %v597 = vmax.f32 %v581, 0.0
        %v598 = vmax.f32 %v582, 0.0
        %v599 = vmax.f32 %v583, 0.0
        %v600 = vmax.f32 %v584, 0.0
        %v601 = vmax.f32 %v585, 0.0
        %v602 = vmax.f32 %v586, 0.0
        %v603 = vmax.f32 %v587, 0.0
        %v604 = vmax.f32 %v588, 0.0
        %v605 = vmax.f32 %v589, 0.0
        %v606 = vmax.f32 %v590, 0.0
        %v607 = vmax.f32 %v591, 0.0
        %v608 = vmax.f32 %v592, 0.0
        %v609 = vsub.f32 %v561, %v529
        %v610 = vsub.f32 %v562, %v530
        %v611 = vsub.f32 %v563, %v531
        %v612 = vsub.f32 %v564, %v532
        %v613 = vsub.f32 %v565, %v533
        %v614 = vsub.f32 %v566, %v534
        %v615 = vsub.f32 %v567, %v535
        %v616 = vsub.f32 %v568, %v536
        %v617 = vsub.f32 %v569, %v537
        %v618 = vsub.f32 %v570, %v538
        %v619 = vsub.f32 %v571, %v539
        %v620 = vsub.f32 %v572, %v540
        %v621 = vsub.f32 %v573, %v541
        %v622 = vsub.f32 %v574, %v542
        %v623 = vsub.f32 %v575, %v543
        %v624 = vsub.f32 %v576, %v544
        %v625 = vmax.f32 %v609, 0.0
        %v626 = vmax.f32 %v610, 0.0
        %v627 = vmax.f32 %v611, 0.0
        %v628 = vmax.f32 %v612, 0.0
        %v629 = vmax.f32 %v613, 0.0
        %v630 = vmax.f32 %v614, 0.0
        %v631 = vmax.f32 %v615, 0.0
        %v632 = vmax.f32 %v616, 0.0
        %v633 = vmax.f32 %v617, 0.0
        %v634 = vmax.f32 %v618, 0.0
        %v635 = vmax.f32 %v619, 0.0
        %v636 = vmax.f32 %v620, 0.0
        %v637 = vmax.f32 %v621, 0.0
        %v638 = vmax.f32 %v622, 0.0
        %v639 = vmax.f32 %v623, 0.0
        %v640 = vmax.f32 %v624, 0.0
        %v641 = vsub.f32 %v497, %v481
        %v642 = vsub.f32 %v498, %v482
        %v643 = vsub.f32 %v499, %v483
        %v644 = vsub.f32 %v500, %v484
        %v645 = vsub.f32 %v501, %v485
        %v646 = vsub.f32 %v502, %v486
        %v647 = vsub.f32 %v503, %v487
        %v648 = vsub.f32 %v504, %v488
        %v649 = vsub.f32 %v505, %v489
        %v650 = vsub.f32 %v506, %v490
        %v651 = vsub.f32 %v507, %v491
        %v652 = vsub.f32 %v508, %v492
        %v653 = vsub.f32 %v509, %v493
        %v654 = vsub.f32 %v510, %v494
        %v655 = vsub.f32 %v511, %v495
        %v656 = vsub.f32 %v512, %v496
        %673 = vrot.lane.b32.xlu0 %v641, 127
        %v674 = vpop.permute.xlu0 %673
        %675 = vrot.lane.b32.xlu0 %v642, 127
        %v676 = vpop.permute.xlu0 %675
        %677 = vrot.lane.b32.xlu0 %v643, 127
        %v678 = vpop.permute.xlu0 %677
        %679 = vrot.lane.b32.xlu0 %v644, 127
        %v680 = vpop.permute.xlu0 %679
        %681 = vrot.lane.b32.xlu0 %v645, 127
        %v682 = vpop.permute.xlu0 %681
        %683 = vrot.lane.b32.xlu0 %v646, 127
        %v684 = vpop.permute.xlu0 %683
        %685 = vrot.lane.b32.xlu0 %v647, 127
        %v686 = vpop.permute.xlu0 %685
        %687 = vrot.lane.b32.xlu0 %v648, 127
        %v688 = vpop.permute.xlu0 %687
        %689 = vrot.lane.b32.xlu0 %v649, 127
        %v690 = vpop.permute.xlu0 %689
        %691 = vrot.lane.b32.xlu0 %v650, 127
        %v692 = vpop.permute.xlu0 %691
        %693 = vrot.lane.b32.xlu0 %v651, 127
        %v694 = vpop.permute.xlu0 %693
        %695 = vrot.lane.b32.xlu0 %v652, 127
        %v696 = vpop.permute.xlu0 %695
        %697 = vrot.lane.b32.xlu0 %v653, 127
        %v698 = vpop.permute.xlu0 %697
        %699 = vrot.lane.b32.xlu0 %v654, 127
        %v700 = vpop.permute.xlu0 %699
        %701 = vrot.lane.b32.xlu0 %v655, 127
        %v702 = vpop.permute.xlu0 %701
        %703 = vrot.lane.b32.xlu0 %v656, 127
        %v704 = vpop.permute.xlu0 %703
        %v721 = vmul.f32 %v641, %v674
        %v722 = vmul.f32 %v642, %v676
        %v723 = vmul.f32 %v643, %v678
        %v724 = vmul.f32 %v644, %v680
        %v725 = vmul.f32 %v645, %v682
        %v726 = vmul.f32 %v646, %v684
        %v727 = vmul.f32 %v647, %v686
        %v728 = vmul.f32 %v648, %v688
        %v729 = vmul.f32 %v649, %v690
        %v730 = vmul.f32 %v650, %v692
        %v731 = vmul.f32 %v651, %v694
        %v732 = vmul.f32 %v652, %v696
        %v733 = vmul.f32 %v653, %v698
        %v734 = vmul.f32 %v654, %v700
        %v735 = vmul.f32 %v655, %v702
        %v736 = vmul.f32 %v656, %v704
        %753 = vrot.lane.b32.xlu0 %v625, 127
        %v754 = vpop.permute.xlu0 %753
        %755 = vrot.lane.b32.xlu0 %v626, 127
        %v756 = vpop.permute.xlu0 %755
        %757 = vrot.lane.b32.xlu0 %v627, 127
        %v758 = vpop.permute.xlu0 %757
        %759 = vrot.lane.b32.xlu0 %v628, 127
        %v760 = vpop.permute.xlu0 %759
        %761 = vrot.lane.b32.xlu0 %v629, 127
        %v762 = vpop.permute.xlu0 %761
        %763 = vrot.lane.b32.xlu0 %v630, 127
        %v764 = vpop.permute.xlu0 %763
        %765 = vrot.lane.b32.xlu0 %v631, 127
        %v766 = vpop.permute.xlu0 %765
        %767 = vrot.lane.b32.xlu0 %v632, 127
        %v768 = vpop.permute.xlu0 %767
        %769 = vrot.lane.b32.xlu0 %v633, 127
        %v770 = vpop.permute.xlu0 %769
        %771 = vrot.lane.b32.xlu0 %v634, 127
        %v772 = vpop.permute.xlu0 %771
        %773 = vrot.lane.b32.xlu0 %v635, 127
        %v774 = vpop.permute.xlu0 %773
        %775 = vrot.lane.b32.xlu0 %v636, 127
        %v776 = vpop.permute.xlu0 %775
        %777 = vrot.lane.b32.xlu0 %v637, 127
        %v778 = vpop.permute.xlu0 %777
        %779 = vrot.lane.b32.xlu0 %v638, 127
        %v780 = vpop.permute.xlu0 %779
        %781 = vrot.lane.b32.xlu0 %v639, 127
        %v782 = vpop.permute.xlu0 %781
        %783 = vrot.lane.b32.xlu0 %v640, 127
        %v784 = vpop.permute.xlu0 %783
        %v801 = vmul.f32 %v593, %v754
        %v802 = vmul.f32 %v594, %v756
        %v803 = vmul.f32 %v595, %v758
        %v804 = vmul.f32 %v596, %v760
        %v805 = vmul.f32 %v597, %v762
        %v806 = vmul.f32 %v598, %v764
        %v807 = vmul.f32 %v599, %v766
        %v808 = vmul.f32 %v600, %v768
        %v809 = vmul.f32 %v601, %v770
        %v810 = vmul.f32 %v602, %v772
        %v811 = vmul.f32 %v603, %v774
        %v812 = vmul.f32 %v604, %v776
        %v813 = vmul.f32 %v605, %v778
        %v814 = vmul.f32 %v606, %v780
        %v815 = vmul.f32 %v607, %v782
        %v816 = vmul.f32 %v608, %v784
        %v817 = vadd.f32 %v721, %v300
        %v818 = vadd.f32 %v722, %v300
        %v819 = vadd.f32 %v723, %v300
        %v820 = vadd.f32 %v724, %v300
        %v821 = vadd.f32 %v725, %v300
        %v822 = vadd.f32 %v726, %v300
        %v823 = vadd.f32 %v727, %v300
        %v824 = vadd.f32 %v728, %v300
        %v825 = vadd.f32 %v729, %v300
        %v826 = vadd.f32 %v730, %v300
        %v827 = vadd.f32 %v731, %v300
        %v828 = vadd.f32 %v732, %v300
        %v829 = vadd.f32 %v733, %v300
        %v830 = vadd.f32 %v734, %v300
        %v831 = vadd.f32 %v735, %v300
        %v832 = vadd.f32 %v736, %v300
        %v833 = vsub.f32 %v817, %v801
        %v834 = vsub.f32 %v818, %v802
        %v835 = vsub.f32 %v819, %v803
        %v836 = vsub.f32 %v820, %v804
        %v837 = vsub.f32 %v821, %v805
        %v838 = vsub.f32 %v822, %v806
        %v839 = vsub.f32 %v823, %v807
        %v840 = vsub.f32 %v824, %v808
        %v841 = vsub.f32 %v825, %v809
        %v842 = vsub.f32 %v826, %v810
        %v843 = vsub.f32 %v827, %v811
        %v844 = vsub.f32 %v828, %v812
        %v845 = vsub.f32 %v829, %v813
        %v846 = vsub.f32 %v830, %v814
        %v847 = vsub.f32 %v831, %v815
        %v848 = vsub.f32 %v832, %v816
        %v849 = vrcp.pop %v833
        %v850 = vmul.f32 %v801, %v849
        %v851 = vrcp.pop %v834
        %v852 = vmul.f32 %v802, %v851
        %v853 = vrcp.pop %v835
        %v854 = vmul.f32 %v803, %v853
        %v855 = vrcp.pop %v836
        %v856 = vmul.f32 %v804, %v855
        %v857 = vrcp.pop %v837
        %v858 = vmul.f32 %v805, %v857
        %v859 = vrcp.pop %v838
        %v860 = vmul.f32 %v806, %v859
        %v861 = vrcp.pop %v839
        %v862 = vmul.f32 %v807, %v861
        %v863 = vrcp.pop %v840
        %v864 = vmul.f32 %v808, %v863
        %v865 = vrcp.pop %v841
        %v866 = vmul.f32 %v809, %v865
        %v867 = vrcp.pop %v842
        %v868 = vmul.f32 %v810, %v867
        %v869 = vrcp.pop %v843
        %v870 = vmul.f32 %v811, %v869
        %v871 = vrcp.pop %v844
        %v872 = vmul.f32 %v812, %v871
        %v873 = vrcp.pop %v845
        %v874 = vmul.f32 %v813, %v873
        %v875 = vrcp.pop %v846
        %v876 = vmul.f32 %v814, %v875
        %v877 = vrcp.pop %v847
        %v878 = vmul.f32 %v815, %v877
        %v879 = vrcp.pop %v848
        %v880 = vmul.f32 %v816, %v879
        %v881 = vsub.f32 %v370, %v305
        %v882 = vsub.f32 %v372, %v305
        %v883 = vsub.f32 %v374, %v305
        %v884 = vsub.f32 %v376, %v305
        %v885 = vsub.f32 %v378, %v305
        %v886 = vsub.f32 %v380, %v305
        %v887 = vsub.f32 %v382, %v305
        %v888 = vsub.f32 %v384, %v305
        %v889 = vsub.f32 %v386, %v305
        %v890 = vsub.f32 %v388, %v305
        %v891 = vsub.f32 %v390, %v305
        %v892 = vsub.f32 %v392, %v305
        %v893 = vsub.f32 %v394, %v305
        %v894 = vsub.f32 %v396, %v305
        %v895 = vsub.f32 %v398, %v305
        %v896 = vsub.f32 %v400, %v305
        %913 = vrot.lane.b32.xlu0 %v881, 1
        %v914 = vpop.permute.xlu0 %913
        %915 = vrot.lane.b32.xlu0 %v882, 1
        %v916 = vpop.permute.xlu0 %915
        %917 = vrot.lane.b32.xlu0 %v883, 1
        %v918 = vpop.permute.xlu0 %917
        %919 = vrot.lane.b32.xlu0 %v884, 1
        %v920 = vpop.permute.xlu0 %919
        %921 = vrot.lane.b32.xlu0 %v885, 1
        %v922 = vpop.permute.xlu0 %921
        %923 = vrot.lane.b32.xlu0 %v886, 1
        %v924 = vpop.permute.xlu0 %923
        %925 = vrot.lane.b32.xlu0 %v887, 1
        %v926 = vpop.permute.xlu0 %925
        %927 = vrot.lane.b32.xlu0 %v888, 1
        %v928 = vpop.permute.xlu0 %927
        %929 = vrot.lane.b32.xlu0 %v889, 1
        %v930 = vpop.permute.xlu0 %929
        %931 = vrot.lane.b32.xlu0 %v890, 1
        %v932 = vpop.permute.xlu0 %931
        %933 = vrot.lane.b32.xlu0 %v891, 1
        %v934 = vpop.permute.xlu0 %933
        %935 = vrot.lane.b32.xlu0 %v892, 1
        %v936 = vpop.permute.xlu0 %935
        %937 = vrot.lane.b32.xlu0 %v893, 1
        %v938 = vpop.permute.xlu0 %937
        %939 = vrot.lane.b32.xlu0 %v894, 1
        %v940 = vpop.permute.xlu0 %939
        %941 = vrot.lane.b32.xlu0 %v895, 1
        %v942 = vpop.permute.xlu0 %941
        %943 = vrot.lane.b32.xlu0 %v896, 1
        %v944 = vpop.permute.xlu0 %943
        %v961 = vsel %vm337, %v914, 0.0
        %v962 = vsel %vm338, %v916, 0.0
        %v963 = vsel %vm339, %v918, 0.0
        %v964 = vsel %vm340, %v920, 0.0
        %v965 = vsel %vm341, %v922, 0.0
        %v966 = vsel %vm342, %v924, 0.0
        %v967 = vsel %vm343, %v926, 0.0
        %v968 = vsel %vm344, %v928, 0.0
        %v969 = vsel %vm345, %v930, 0.0
        %v970 = vsel %vm346, %v932, 0.0
        %v971 = vsel %vm347, %v934, 0.0
        %v972 = vsel %vm348, %v936, 0.0
        %v973 = vsel %vm349, %v938, 0.0
        %v974 = vsel %vm350, %v940, 0.0
        %v975 = vsel %vm351, %v942, 0.0
        %v976 = vsel %vm352, %v944, 0.0
        %993 = vrot.lane.b32.xlu0 %v850, 127
        %v994 = vpop.permute.xlu0 %993
        %995 = vrot.lane.b32.xlu0 %v852, 127
        %v996 = vpop.permute.xlu0 %995
        %997 = vrot.lane.b32.xlu0 %v854, 127
        %v998 = vpop.permute.xlu0 %997
        %999 = vrot.lane.b32.xlu0 %v856, 127
        %v1000 = vpop.permute.xlu0 %999
        %1001 = vrot.lane.b32.xlu0 %v858, 127
        %v1002 = vpop.permute.xlu0 %1001
        %1003 = vrot.lane.b32.xlu0 %v860, 127
        %v1004 = vpop.permute.xlu0 %1003
        %1005 = vrot.lane.b32.xlu0 %v862, 127
        %v1006 = vpop.permute.xlu0 %1005
        %1007 = vrot.lane.b32.xlu0 %v864, 127
        %v1008 = vpop.permute.xlu0 %1007
        %1009 = vrot.lane.b32.xlu0 %v866, 127
        %v1010 = vpop.permute.xlu0 %1009
        %1011 = vrot.lane.b32.xlu0 %v868, 127
        %v1012 = vpop.permute.xlu0 %1011
        %1013 = vrot.lane.b32.xlu0 %v870, 127
        %v1014 = vpop.permute.xlu0 %1013
        %1015 = vrot.lane.b32.xlu0 %v872, 127
        %v1016 = vpop.permute.xlu0 %1015
        %1017 = vrot.lane.b32.xlu0 %v874, 127
        %v1018 = vpop.permute.xlu0 %1017
        %1019 = vrot.lane.b32.xlu0 %v876, 127
        %v1020 = vpop.permute.xlu0 %1019
        %1021 = vrot.lane.b32.xlu0 %v878, 127
        %v1022 = vpop.permute.xlu0 %1021
        %1023 = vrot.lane.b32.xlu0 %v880, 127
        %v1024 = vpop.permute.xlu0 %1023
        %v1041 = vsel %vm337, %v994, 0.0
        %v1042 = vsel %vm338, %v996, 0.0
        %v1043 = vsel %vm339, %v998, 0.0
        %v1044 = vsel %vm340, %v1000, 0.0
        %v1045 = vsel %vm341, %v1002, 0.0
        %v1046 = vsel %vm342, %v1004, 0.0
        %v1047 = vsel %vm343, %v1006, 0.0
        %v1048 = vsel %vm344, %v1008, 0.0
        %v1049 = vsel %vm345, %v1010, 0.0
        %v1050 = vsel %vm346, %v1012, 0.0
        %v1051 = vsel %vm347, %v1014, 0.0
        %v1052 = vsel %vm348, %v1016, 0.0
        %v1053 = vsel %vm349, %v1018, 0.0
        %v1054 = vsel %vm350, %v1020, 0.0
        %v1055 = vsel %vm351, %v1022, 0.0
        %v1056 = vsel %vm352, %v1024, 0.0
        %v1057 = vmul.f32 %v961, -1.0
        %v1058 = vmul.f32 %v962, -1.0
        %v1059 = vmul.f32 %v963, -1.0
        %v1060 = vmul.f32 %v964, -1.0
        %v1061 = vmul.f32 %v965, -1.0
        %v1062 = vmul.f32 %v966, -1.0
        %v1063 = vmul.f32 %v967, -1.0
        %v1064 = vmul.f32 %v968, -1.0
        %v1065 = vmul.f32 %v969, -1.0
        %v1066 = vmul.f32 %v970, -1.0
        %v1067 = vmul.f32 %v971, -1.0
        %v1068 = vmul.f32 %v972, -1.0
        %v1069 = vmul.f32 %v973, -1.0
        %v1070 = vmul.f32 %v974, -1.0
        %v1071 = vmul.f32 %v975, -1.0
        %v1072 = vmul.f32 %v976, -1.0
        %v1073 = vmul.f32 %v1057, 1.442695
        %v1074 = vpow.pop %v1073
        %v1075 = vmul.f32 %v1058, 1.442695
        %v1076 = vpow.pop %v1075
        %v1077 = vmul.f32 %v1059, 1.442695
        %v1078 = vpow.pop %v1077
        %v1079 = vmul.f32 %v1060, 1.442695
        %v1080 = vpow.pop %v1079
        %v1081 = vmul.f32 %v1061, 1.442695
        %v1082 = vpow.pop %v1081
        %v1083 = vmul.f32 %v1062, 1.442695
        %v1084 = vpow.pop %v1083
        %v1085 = vmul.f32 %v1063, 1.442695
        %v1086 = vpow.pop %v1085
        %v1087 = vmul.f32 %v1064, 1.442695
        %v1088 = vpow.pop %v1087
        %v1089 = vmul.f32 %v1065, 1.442695
        %v1090 = vpow.pop %v1089
        %v1091 = vmul.f32 %v1066, 1.442695
        %v1092 = vpow.pop %v1091
        %v1093 = vmul.f32 %v1067, 1.442695
        %v1094 = vpow.pop %v1093
        %v1095 = vmul.f32 %v1068, 1.442695
        %v1096 = vpow.pop %v1095
        %v1097 = vmul.f32 %v1069, 1.442695
        %v1098 = vpow.pop %v1097
        %v1099 = vmul.f32 %v1070, 1.442695
        %v1100 = vpow.pop %v1099
        %v1101 = vmul.f32 %v1071, 1.442695
        %v1102 = vpow.pop %v1101
        %v1103 = vmul.f32 %v1072, 1.442695
        %v1104 = vpow.pop %v1103
        %v1105 = vmul.f32 %v353, %v1074
        %v1106 = vmul.f32 %v354, %v1076
        %v1107 = vmul.f32 %v355, %v1078
        %v1108 = vmul.f32 %v356, %v1080
        %v1109 = vmul.f32 %v357, %v1082
        %v1110 = vmul.f32 %v358, %v1084
        %v1111 = vmul.f32 %v359, %v1086
        %v1112 = vmul.f32 %v360, %v1088
        %v1113 = vmul.f32 %v361, %v1090
        %v1114 = vmul.f32 %v362, %v1092
        %v1115 = vmul.f32 %v363, %v1094
        %v1116 = vmul.f32 %v364, %v1096
        %v1117 = vmul.f32 %v365, %v1098
        %v1118 = vmul.f32 %v366, %v1100
        %v1119 = vmul.f32 %v367, %v1102
        %v1120 = vmul.f32 %v368, %v1104
        %v1121 = vmul.f32 %v1041, -1.0
        %v1122 = vmul.f32 %v1042, -1.0
        %v1123 = vmul.f32 %v1043, -1.0
        %v1124 = vmul.f32 %v1044, -1.0
        %v1125 = vmul.f32 %v1045, -1.0
        %v1126 = vmul.f32 %v1046, -1.0
        %v1127 = vmul.f32 %v1047, -1.0
        %v1128 = vmul.f32 %v1048, -1.0
        %v1129 = vmul.f32 %v1049, -1.0
        %v1130 = vmul.f32 %v1050, -1.0
        %v1131 = vmul.f32 %v1051, -1.0
        %v1132 = vmul.f32 %v1052, -1.0
        %v1133 = vmul.f32 %v1053, -1.0
        %v1134 = vmul.f32 %v1054, -1.0
        %v1135 = vmul.f32 %v1055, -1.0
        %v1136 = vmul.f32 %v1056, -1.0
        %v1137 = vmul.f32 %v1121, 1.442695
        %v1138 = vpow.pop %v1137
        %v1139 = vmul.f32 %v1122, 1.442695
        %v1140 = vpow.pop %v1139
        %v1141 = vmul.f32 %v1123, 1.442695
        %v1142 = vpow.pop %v1141
        %v1143 = vmul.f32 %v1124, 1.442695
        %v1144 = vpow.pop %v1143
        %v1145 = vmul.f32 %v1125, 1.442695
        %v1146 = vpow.pop %v1145
        %v1147 = vmul.f32 %v1126, 1.442695
        %v1148 = vpow.pop %v1147
        %v1149 = vmul.f32 %v1127, 1.442695
        %v1150 = vpow.pop %v1149
        %v1151 = vmul.f32 %v1128, 1.442695
        %v1152 = vpow.pop %v1151
        %v1153 = vmul.f32 %v1129, 1.442695
        %v1154 = vpow.pop %v1153
        %v1155 = vmul.f32 %v1130, 1.442695
        %v1156 = vpow.pop %v1155
        %v1157 = vmul.f32 %v1131, 1.442695
        %v1158 = vpow.pop %v1157
        %v1159 = vmul.f32 %v1132, 1.442695
        %v1160 = vpow.pop %v1159
        %v1161 = vmul.f32 %v1133, 1.442695
        %v1162 = vpow.pop %v1161
        %v1163 = vmul.f32 %v1134, 1.442695
        %v1164 = vpow.pop %v1163
        %v1165 = vmul.f32 %v1135, 1.442695
        %v1166 = vpow.pop %v1165
        %v1167 = vmul.f32 %v1136, 1.442695
        %v1168 = vpow.pop %v1167
        %v1169 = vmul.f32 %v353, %v1138
        %v1170 = vmul.f32 %v354, %v1140
        %v1171 = vmul.f32 %v355, %v1142
        %v1172 = vmul.f32 %v356, %v1144
        %v1173 = vmul.f32 %v357, %v1146
        %v1174 = vmul.f32 %v358, %v1148
        %v1175 = vmul.f32 %v359, %v1150
        %v1176 = vmul.f32 %v360, %v1152
        %v1177 = vmul.f32 %v361, %v1154
        %v1178 = vmul.f32 %v362, %v1156
        %v1179 = vmul.f32 %v363, %v1158
        %v1180 = vmul.f32 %v364, %v1160
        %v1181 = vmul.f32 %v365, %v1162
        %v1182 = vmul.f32 %v366, %v1164
        %v1183 = vmul.f32 %v367, %v1166
        %v1184 = vmul.f32 %v368, %v1168
        %s1185 = smul.u32 %s24, 128
        %v1186 = vlaneseq
        %v1187 = vshrl.u32 %v1186, 7
        %v1188 = vadd.s32 %v1187, 8
        %v1189 = vadd.s32 %v1187, 16
        %v1190 = vadd.s32 %v1187, 24
        %v1191 = vadd.s32 %v1187, 32
        %v1192 = vadd.s32 %v1187, 40
        %v1193 = vadd.s32 %v1187, 48
        %v1194 = vadd.s32 %v1187, 56
        %v1195 = vadd.s32 %v1187, 64
        %v1196 = vadd.s32 %v1187, 72
        %v1197 = vadd.s32 %v1187, 80
        %v1198 = vadd.s32 %v1187, 88
        %v1199 = vadd.s32 %v1187, 96
        %v1200 = vadd.s32 %v1187, 104
        %v1201 = vadd.s32 %v1187, 112
        %v1202 = vadd.s32 %v1187, 120
        %v1203 = vstv %s1185
        %v1204 = vadd.s32 %v1203, %v1187
        %v1205 = vadd.s32 %v1203, %v1188
        %v1206 = vadd.s32 %v1203, %v1189
        %v1207 = vadd.s32 %v1203, %v1190
        %v1208 = vadd.s32 %v1203, %v1191
        %v1209 = vadd.s32 %v1203, %v1192
        %v1210 = vadd.s32 %v1203, %v1193
        %v1211 = vadd.s32 %v1203, %v1194
        %v1212 = vadd.s32 %v1203, %v1195
        %v1213 = vadd.s32 %v1203, %v1196
        %v1214 = vadd.s32 %v1203, %v1197
        %v1215 = vadd.s32 %v1203, %v1198
        %v1216 = vadd.s32 %v1203, %v1199
        %v1217 = vadd.s32 %v1203, %v1200
        %v1218 = vadd.s32 %v1203, %v1201
        %v1219 = vadd.s32 %v1203, %v1202
        %s1220 = smul.u32 %s25, 128
        %v1221 = vlaneseq
        %v1222 = vand.u32 %v1221, 127
        %v1223 = vstv %s1220
        %v1224 = vadd.s32 %v1223, %v1222
        %vm1225 = vcmp.lt.s32.totalorder %v1204, %v1224
        %vm1226 = vcmp.lt.s32.totalorder %v1205, %v1224
        %vm1227 = vcmp.lt.s32.totalorder %v1206, %v1224
        %vm1228 = vcmp.lt.s32.totalorder %v1207, %v1224
        %vm1229 = vcmp.lt.s32.totalorder %v1208, %v1224
        %vm1230 = vcmp.lt.s32.totalorder %v1209, %v1224
        %vm1231 = vcmp.lt.s32.totalorder %v1210, %v1224
        %vm1232 = vcmp.lt.s32.totalorder %v1211, %v1224
        %vm1233 = vcmp.lt.s32.totalorder %v1212, %v1224
        %vm1234 = vcmp.lt.s32.totalorder %v1213, %v1224
        %vm1235 = vcmp.lt.s32.totalorder %v1214, %v1224
        %vm1236 = vcmp.lt.s32.totalorder %v1215, %v1224
        %vm1237 = vcmp.lt.s32.totalorder %v1216, %v1224
        %vm1238 = vcmp.lt.s32.totalorder %v1217, %v1224
        %vm1239 = vcmp.lt.s32.totalorder %v1218, %v1224
        %vm1240 = vcmp.lt.s32.totalorder %v1219, %v1224
        %vm1241 = vcmp.ne.s32.totalorder %v1204, %v1224
        %vm1242 = vcmp.ne.s32.totalorder %v1205, %v1224
        %vm1243 = vcmp.ne.s32.totalorder %v1206, %v1224
        %vm1244 = vcmp.ne.s32.totalorder %v1207, %v1224
        %vm1245 = vcmp.ne.s32.totalorder %v1208, %v1224
        %vm1246 = vcmp.ne.s32.totalorder %v1209, %v1224
        %vm1247 = vcmp.ne.s32.totalorder %v1210, %v1224
        %vm1248 = vcmp.ne.s32.totalorder %v1211, %v1224
        %vm1249 = vcmp.ne.s32.totalorder %v1212, %v1224
        %vm1250 = vcmp.ne.s32.totalorder %v1213, %v1224
        %vm1251 = vcmp.ne.s32.totalorder %v1214, %v1224
        %vm1252 = vcmp.ne.s32.totalorder %v1215, %v1224
        %vm1253 = vcmp.ne.s32.totalorder %v1216, %v1224
        %vm1254 = vcmp.ne.s32.totalorder %v1217, %v1224
        %vm1255 = vcmp.ne.s32.totalorder %v1218, %v1224
        %vm1256 = vcmp.ne.s32.totalorder %v1219, %v1224
        %p1257 = scmp.eq.s32.totalorder %s25, 0
        // Predicated region
        $region37: #{tpu_custom_call.1} parent=31 // pred_check
          %p1258 = pneg %p1257
        $region38: #{tpu_custom_call.1} parent=31 // pred_check_branch
          %1260 = sbr.rel (%p1258) target = $region40
        $region39: #{tpu_custom_call.1} parent=31 // pred_region
          %1261 = vst [vmem:[%s230] sm:$0x3] 0.0
        $region40: #{tpu_custom_call.1} parent=31 // pred_fallthru
          _
        %1262 = vset.pattern.permute.xlu0 2
        %1263 = vperm.xlu0 %1262, %v850
        %v1264 = vpop.permute.xlu0 %1263
        %1266 = vset.pattern.permute.xlu0 2
        %1267 = vperm.xlu0 %1266, %v852
        %v1268 = vpop.permute.xlu0 %1267
        %1270 = vset.pattern.permute.xlu0 2
        %1271 = vperm.xlu0 %1270, %v854
        %v1272 = vpop.permute.xlu0 %1271
        %1274 = vset.pattern.permute.xlu0 2
        %1275 = vperm.xlu0 %1274, %v856
        %v1276 = vpop.permute.xlu0 %1275
        %1278 = vset.pattern.permute.xlu0 2
        %1279 = vperm.xlu0 %1278, %v858
        %v1280 = vpop.permute.xlu0 %1279
        %1282 = vset.pattern.permute.xlu0 2
        %1283 = vperm.xlu0 %1282, %v860
        %v1284 = vpop.permute.xlu0 %1283
        %1286 = vset.pattern.permute.xlu0 2
        %1287 = vperm.xlu0 %1286, %v862
        %v1288 = vpop.permute.xlu0 %1287
        %1290 = vset.pattern.permute.xlu0 2
        %1291 = vperm.xlu0 %1290, %v864
        %v1292 = vpop.permute.xlu0 %1291
        %1294 = vset.pattern.permute.xlu0 2
        %1295 = vperm.xlu0 %1294, %v866
        %v1296 = vpop.permute.xlu0 %1295
        %1298 = vset.pattern.permute.xlu0 2
        %1299 = vperm.xlu0 %1298, %v868
        %v1300 = vpop.permute.xlu0 %1299
        %1302 = vset.pattern.permute.xlu0 2
        %1303 = vperm.xlu0 %1302, %v870
        %v1304 = vpop.permute.xlu0 %1303
        %1306 = vset.pattern.permute.xlu0 2
        %1307 = vperm.xlu0 %1306, %v872
        %v1308 = vpop.permute.xlu0 %1307
        %1310 = vset.pattern.permute.xlu0 2
        %1311 = vperm.xlu0 %1310, %v874
        %v1312 = vpop.permute.xlu0 %1311
        %1314 = vset.pattern.permute.xlu0 2
        %1315 = vperm.xlu0 %1314, %v876
        %v1316 = vpop.permute.xlu0 %1315
        %1318 = vset.pattern.permute.xlu0 2
        %1319 = vperm.xlu0 %1318, %v878
        %v1320 = vpop.permute.xlu0 %1319
        %1322 = vset.pattern.permute.xlu0 2
        %1323 = vperm.xlu0 %1322, %v880
        %v1324 = vpop.permute.xlu0 %1323
        %v1326 = vlaneseq
        %v1327 = vshrl.u32 %v1326, 7
        %v1328 = vsub.s32 2, %v1327
        %v1329 = vrot.slane %v304, %v1328
        %vm1330 = vcmp.gt.f32.partialorder %v1264, %v1329
        %vm1331 = vcmp.gt.f32.partialorder %v1268, %v1329
        %vm1332 = vcmp.gt.f32.partialorder %v1272, %v1329
        %vm1333 = vcmp.gt.f32.partialorder %v1276, %v1329
        %vm1334 = vcmp.gt.f32.partialorder %v1280, %v1329
        %vm1335 = vcmp.gt.f32.partialorder %v1284, %v1329
        %vm1336 = vcmp.gt.f32.partialorder %v1288, %v1329
        %vm1337 = vcmp.gt.f32.partialorder %v1292, %v1329
        %vm1338 = vcmp.gt.f32.partialorder %v1296, %v1329
        %vm1339 = vcmp.gt.f32.partialorder %v1300, %v1329
        %vm1340 = vcmp.gt.f32.partialorder %v1304, %v1329
        %vm1341 = vcmp.gt.f32.partialorder %v1308, %v1329
        %vm1342 = vcmp.gt.f32.partialorder %v1312, %v1329
        %vm1343 = vcmp.gt.f32.partialorder %v1316, %v1329
        %vm1344 = vcmp.gt.f32.partialorder %v1320, %v1329
        %vm1345 = vcmp.gt.f32.partialorder %v1324, %v1329
        %vm1346 = vcmp.eq.f32.partialorder %v1264, %v1329
        %vm1347 = vcmp.eq.f32.partialorder %v1268, %v1329
        %vm1348 = vcmp.eq.f32.partialorder %v1272, %v1329
        %vm1349 = vcmp.eq.f32.partialorder %v1276, %v1329
        %vm1350 = vcmp.eq.f32.partialorder %v1280, %v1329
        %vm1351 = vcmp.eq.f32.partialorder %v1284, %v1329
        %vm1352 = vcmp.eq.f32.partialorder %v1288, %v1329
        %vm1353 = vcmp.eq.f32.partialorder %v1292, %v1329
        %vm1354 = vcmp.eq.f32.partialorder %v1296, %v1329
        %vm1355 = vcmp.eq.f32.partialorder %v1300, %v1329
        %vm1356 = vcmp.eq.f32.partialorder %v1304, %v1329
        %vm1357 = vcmp.eq.f32.partialorder %v1308, %v1329
        %vm1358 = vcmp.eq.f32.partialorder %v1312, %v1329
        %vm1359 = vcmp.eq.f32.partialorder %v1316, %v1329
        %vm1360 = vcmp.eq.f32.partialorder %v1320, %v1329
        %vm1361 = vcmp.eq.f32.partialorder %v1324, %v1329
        %vm1362 = vmand %vm1346, %vm1225
        %vm1363 = vmand %vm1347, %vm1226
        %vm1364 = vmand %vm1348, %vm1227
        %vm1365 = vmand %vm1349, %vm1228
        %vm1366 = vmand %vm1350, %vm1229
        %vm1367 = vmand %vm1351, %vm1230
        %vm1368 = vmand %vm1352, %vm1231
        %vm1369 = vmand %vm1353, %vm1232
        %vm1370 = vmand %vm1354, %vm1233
        %vm1371 = vmand %vm1355, %vm1234
        %vm1372 = vmand %vm1356, %vm1235
        %vm1373 = vmand %vm1357, %vm1236
        %vm1374 = vmand %vm1358, %vm1237
        %vm1375 = vmand %vm1359, %vm1238
        %vm1376 = vmand %vm1360, %vm1239
        %vm1377 = vmand %vm1361, %vm1240
        %vm1378 = vmor %vm1330, %vm1362
        %vm1379 = vmor %vm1331, %vm1363
        %vm1380 = vmor %vm1332, %vm1364
        %vm1381 = vmor %vm1333, %vm1365
        %vm1382 = vmor %vm1334, %vm1366
        %vm1383 = vmor %vm1335, %vm1367
        %vm1384 = vmor %vm1336, %vm1368
        %vm1385 = vmor %vm1337, %vm1369
        %vm1386 = vmor %vm1338, %vm1370
        %vm1387 = vmor %vm1339, %vm1371
        %vm1388 = vmor %vm1340, %vm1372
        %vm1389 = vmor %vm1341, %vm1373
        %vm1390 = vmor %vm1342, %vm1374
        %vm1391 = vmor %vm1343, %vm1375
        %vm1392 = vmor %vm1344, %vm1376
        %vm1393 = vmor %vm1345, %vm1377
        %vm1394 = vmand %vm1378, %vm1241
        %vm1395 = vmand %vm1379, %vm1242
        %vm1396 = vmand %vm1380, %vm1243
        %vm1397 = vmand %vm1381, %vm1244
        %vm1398 = vmand %vm1382, %vm1245
        %vm1399 = vmand %vm1383, %vm1246
        %vm1400 = vmand %vm1384, %vm1247
        %vm1401 = vmand %vm1385, %vm1248
        %vm1402 = vmand %vm1386, %vm1249
        %vm1403 = vmand %vm1387, %vm1250
        %vm1404 = vmand %vm1388, %vm1251
        %vm1405 = vmand %vm1389, %vm1252
        %vm1406 = vmand %vm1390, %vm1253
        %vm1407 = vmand %vm1391, %vm1254
        %vm1408 = vmand %vm1392, %vm1255
        %vm1409 = vmand %vm1393, %vm1256
        %v1410 = vsel %vm1394, 1.0, 0.0
        %v1411 = vsel %vm1395, 1.0, 0.0
        %v1412 = vsel %vm1396, 1.0, 0.0
        %v1413 = vsel %vm1397, 1.0, 0.0
        %v1414 = vsel %vm1398, 1.0, 0.0
        %v1415 = vsel %vm1399, 1.0, 0.0
        %v1416 = vsel %vm1400, 1.0, 0.0
        %v1417 = vsel %vm1401, 1.0, 0.0
        %v1418 = vsel %vm1402, 1.0, 0.0
        %v1419 = vsel %vm1403, 1.0, 0.0
        %v1420 = vsel %vm1404, 1.0, 0.0
        %v1421 = vsel %vm1405, 1.0, 0.0
        %v1422 = vsel %vm1406, 1.0, 0.0
        %v1423 = vsel %vm1407, 1.0, 0.0
        %v1424 = vsel %vm1408, 1.0, 0.0
        %v1425 = vsel %vm1409, 1.0, 0.0
        %1427 = vset.pattern.permute.xlu0 1
        %1428 = vperm.xlu0 %1427, %v1105
        %v1429 = vpop.permute.xlu0 %1428
        %1432 = vset.pattern.permute.xlu0 1
        %1433 = vperm.xlu0 %1432, %v1106
        %v1434 = vpop.permute.xlu0 %1433
        %1437 = vset.pattern.permute.xlu0 1
        %1438 = vperm.xlu0 %1437, %v1107
        %v1439 = vpop.permute.xlu0 %1438
        %1442 = vset.pattern.permute.xlu0 1
        %1443 = vperm.xlu0 %1442, %v1108
        %v1444 = vpop.permute.xlu0 %1443
        %1447 = vset.pattern.permute.xlu0 1
        %1448 = vperm.xlu0 %1447, %v1109
        %v1449 = vpop.permute.xlu0 %1448
        %1452 = vset.pattern.permute.xlu0 1
        %1453 = vperm.xlu0 %1452, %v1110
        %v1454 = vpop.permute.xlu0 %1453
        %1457 = vset.pattern.permute.xlu0 1
        %1458 = vperm.xlu0 %1457, %v1111
        %v1459 = vpop.permute.xlu0 %1458
        %1462 = vset.pattern.permute.xlu0 1
        %1463 = vperm.xlu0 %1462, %v1112
        %v1464 = vpop.permute.xlu0 %1463
        %1467 = vset.pattern.permute.xlu0 1
        %1468 = vperm.xlu0 %1467, %v1113
        %v1469 = vpop.permute.xlu0 %1468
        %1472 = vset.pattern.permute.xlu0 1
        %1473 = vperm.xlu0 %1472, %v1114
        %v1474 = vpop.permute.xlu0 %1473
        %1477 = vset.pattern.permute.xlu0 1
        %1478 = vperm.xlu0 %1477, %v1115
        %v1479 = vpop.permute.xlu0 %1478
        %1482 = vset.pattern.permute.xlu0 1
        %1483 = vperm.xlu0 %1482, %v1116
        %v1484 = vpop.permute.xlu0 %1483
        %1487 = vset.pattern.permute.xlu0 1
        %1488 = vperm.xlu0 %1487, %v1117
        %v1489 = vpop.permute.xlu0 %1488
        %1492 = vset.pattern.permute.xlu0 1
        %1493 = vperm.xlu0 %1492, %v1118
        %v1494 = vpop.permute.xlu0 %1493
        %1497 = vset.pattern.permute.xlu0 1
        %1498 = vperm.xlu0 %1497, %v1119
        %v1499 = vpop.permute.xlu0 %1498
        %1502 = vset.pattern.permute.xlu0 1
        %1503 = vperm.xlu0 %1502, %v1120
        %v1504 = vpop.permute.xlu0 %1503
        %v1506 = vmul.f32 %v1410, %v1429
        %v1507 = vmul.f32 %v1411, %v1434
        %v1508 = vmul.f32 %v1412, %v1439
        %v1509 = vmul.f32 %v1413, %v1444
        %v1510 = vmul.f32 %v1414, %v1449
        %v1511 = vmul.f32 %v1415, %v1454
        %v1512 = vmul.f32 %v1416, %v1459
        %v1513 = vmul.f32 %v1417, %v1464
        %v1514 = vmul.f32 %v1418, %v1469
        %v1515 = vmul.f32 %v1419, %v1474
        %v1516 = vmul.f32 %v1420, %v1479
        %v1517 = vmul.f32 %v1421, %v1484
        %v1518 = vmul.f32 %v1422, %v1489
        %v1519 = vmul.f32 %v1423, %v1494
        %v1520 = vmul.f32 %v1424, %v1499
        %v1521 = vmul.f32 %v1425, %v1504
        %v1522 = vadd.f32 %v1506, %v1507
        %v1523 = vadd.f32 %v1522, %v1508
        %v1524 = vadd.f32 %v1523, %v1509
        %v1525 = vadd.f32 %v1524, %v1510
        %v1526 = vadd.f32 %v1525, %v1511
        %v1527 = vadd.f32 %v1526, %v1512
        %v1528 = vadd.f32 %v1527, %v1513
        %v1529 = vadd.f32 %v1528, %v1514
        %v1530 = vadd.f32 %v1529, %v1515
        %v1531 = vadd.f32 %v1530, %v1516
        %v1532 = vadd.f32 %v1531, %v1517
        %v1533 = vadd.f32 %v1532, %v1518
        %v1534 = vadd.f32 %v1533, %v1519
        %v1535 = vadd.f32 %v1534, %v1520
        %v1536 = vadd.f32 %v1535, %v1521
        %v1537 = vrot.slane %v1536, 4
        %v1538 = vadd.f32 %v1536, %v1537
        %v1539 = vrot.slane %v1538, 2
        %v1540 = vadd.f32 %v1538, %v1539
        %v1541 = vrot.slane %v1540, 1
        %v1542 = vadd.f32 %v1540, %v1541
        %v1543 = vmul.f32 %v1542, %v317
        %1545 = vset.pattern.permute.xlu0 0
        %1546 = vperm.xlu0 %1545, %v370
        %v1547 = vpop.permute.xlu0 %1546
        %1550 = vset.pattern.permute.xlu0 0
        %1551 = vperm.xlu0 %1550, %v372
        %v1552 = vpop.permute.xlu0 %1551
        %1555 = vset.pattern.permute.xlu0 0
        %1556 = vperm.xlu0 %1555, %v374
        %v1557 = vpop.permute.xlu0 %1556
        %1560 = vset.pattern.permute.xlu0 0
        %1561 = vperm.xlu0 %1560, %v376
        %v1562 = vpop.permute.xlu0 %1561
        %1565 = vset.pattern.permute.xlu0 0
        %1566 = vperm.xlu0 %1565, %v378
        %v1567 = vpop.permute.xlu0 %1566
        %1570 = vset.pattern.permute.xlu0 0
        %1571 = vperm.xlu0 %1570, %v380
        %v1572 = vpop.permute.xlu0 %1571
        %1575 = vset.pattern.permute.xlu0 0
        %1576 = vperm.xlu0 %1575, %v382
        %v1577 = vpop.permute.xlu0 %1576
        %1580 = vset.pattern.permute.xlu0 0
        %1581 = vperm.xlu0 %1580, %v384
        %v1582 = vpop.permute.xlu0 %1581
        %1585 = vset.pattern.permute.xlu0 0
        %1586 = vperm.xlu0 %1585, %v386
        %v1587 = vpop.permute.xlu0 %1586
        %1590 = vset.pattern.permute.xlu0 0
        %1591 = vperm.xlu0 %1590, %v388
        %v1592 = vpop.permute.xlu0 %1591
        %1595 = vset.pattern.permute.xlu0 0
        %1596 = vperm.xlu0 %1595, %v390
        %v1597 = vpop.permute.xlu0 %1596
        %1600 = vset.pattern.permute.xlu0 0
        %1601 = vperm.xlu0 %1600, %v392
        %v1602 = vpop.permute.xlu0 %1601
        %1605 = vset.pattern.permute.xlu0 0
        %1606 = vperm.xlu0 %1605, %v394
        %v1607 = vpop.permute.xlu0 %1606
        %1610 = vset.pattern.permute.xlu0 0
        %1611 = vperm.xlu0 %1610, %v396
        %v1612 = vpop.permute.xlu0 %1611
        %1615 = vset.pattern.permute.xlu0 0
        %1616 = vperm.xlu0 %1615, %v398
        %v1617 = vpop.permute.xlu0 %1616
        %1620 = vset.pattern.permute.xlu0 0
        %1621 = vperm.xlu0 %1620, %v400
        %v1622 = vpop.permute.xlu0 %1621
        %v1624 = vlaneseq
        %v1625 = vshrl.u32 %v1624, 7
        %v1626 = vsub.s32 0, %v1625
        %v1627 = vrot.slane %v272, %v1626
        %vm1628 = vcmp.gt.f32.partialorder %v1547, %v1627
        %vm1629 = vcmp.gt.f32.partialorder %v1552, %v1627
        %vm1630 = vcmp.gt.f32.partialorder %v1557, %v1627
        %vm1631 = vcmp.gt.f32.partialorder %v1562, %v1627
        %vm1632 = vcmp.gt.f32.partialorder %v1567, %v1627
        %vm1633 = vcmp.gt.f32.partialorder %v1572, %v1627
        %vm1634 = vcmp.gt.f32.partialorder %v1577, %v1627
        %vm1635 = vcmp.gt.f32.partialorder %v1582, %v1627
        %vm1636 = vcmp.gt.f32.partialorder %v1587, %v1627
        %vm1637 = vcmp.gt.f32.partialorder %v1592, %v1627
        %vm1638 = vcmp.gt.f32.partialorder %v1597, %v1627
        %vm1639 = vcmp.gt.f32.partialorder %v1602, %v1627
        %vm1640 = vcmp.gt.f32.partialorder %v1607, %v1627
        %vm1641 = vcmp.gt.f32.partialorder %v1612, %v1627
        %vm1642 = vcmp.gt.f32.partialorder %v1617, %v1627
        %vm1643 = vcmp.gt.f32.partialorder %v1622, %v1627
        %vm1644 = vcmp.eq.f32.partialorder %v1547, %v1627
        %vm1645 = vcmp.eq.f32.partialorder %v1552, %v1627
        %vm1646 = vcmp.eq.f32.partialorder %v1557, %v1627
        %vm1647 = vcmp.eq.f32.partialorder %v1562, %v1627
        %vm1648 = vcmp.eq.f32.partialorder %v1567, %v1627
        %vm1649 = vcmp.eq.f32.partialorder %v1572, %v1627
        %vm1650 = vcmp.eq.f32.partialorder %v1577, %v1627
        %vm1651 = vcmp.eq.f32.partialorder %v1582, %v1627
        %vm1652 = vcmp.eq.f32.partialorder %v1587, %v1627
        %vm1653 = vcmp.eq.f32.partialorder %v1592, %v1627
        %vm1654 = vcmp.eq.f32.partialorder %v1597, %v1627
        %vm1655 = vcmp.eq.f32.partialorder %v1602, %v1627
        %vm1656 = vcmp.eq.f32.partialorder %v1607, %v1627
        %vm1657 = vcmp.eq.f32.partialorder %v1612, %v1627
        %vm1658 = vcmp.eq.f32.partialorder %v1617, %v1627
        %vm1659 = vcmp.eq.f32.partialorder %v1622, %v1627
        %vm1660 = vmand %vm1644, %vm1225
        %vm1661 = vmand %vm1645, %vm1226
        %vm1662 = vmand %vm1646, %vm1227
        %vm1663 = vmand %vm1647, %vm1228
        %vm1664 = vmand %vm1648, %vm1229
        %vm1665 = vmand %vm1649, %vm1230
        %vm1666 = vmand %vm1650, %vm1231
        %vm1667 = vmand %vm1651, %vm1232
        %vm1668 = vmand %vm1652, %vm1233
        %vm1669 = vmand %vm1653, %vm1234
        %vm1670 = vmand %vm1654, %vm1235
        %vm1671 = vmand %vm1655, %vm1236
        %vm1672 = vmand %vm1656, %vm1237
        %vm1673 = vmand %vm1657, %vm1238
        %vm1674 = vmand %vm1658, %vm1239
        %vm1675 = vmand %vm1659, %vm1240
        %vm1676 = vmor %vm1628, %vm1660
        %vm1677 = vmor %vm1629, %vm1661
        %vm1678 = vmor %vm1630, %vm1662
        %vm1679 = vmor %vm1631, %vm1663
        %vm1680 = vmor %vm1632, %vm1664
        %vm1681 = vmor %vm1633, %vm1665
        %vm1682 = vmor %vm1634, %vm1666
        %vm1683 = vmor %vm1635, %vm1667
        %vm1684 = vmor %vm1636, %vm1668
        %vm1685 = vmor %vm1637, %vm1669
        %vm1686 = vmor %vm1638, %vm1670
        %vm1687 = vmor %vm1639, %vm1671
        %vm1688 = vmor %vm1640, %vm1672
        %vm1689 = vmor %vm1641, %vm1673
        %vm1690 = vmor %vm1642, %vm1674
        %vm1691 = vmor %vm1643, %vm1675
        %vm1692 = vmand %vm1676, %vm1241
        %vm1693 = vmand %vm1677, %vm1242
        %vm1694 = vmand %vm1678, %vm1243
        %vm1695 = vmand %vm1679, %vm1244
        %vm1696 = vmand %vm1680, %vm1245
        %vm1697 = vmand %vm1681, %vm1246
        %vm1698 = vmand %vm1682, %vm1247
        %vm1699 = vmand %vm1683, %vm1248
        %vm1700 = vmand %vm1684, %vm1249
        %vm1701 = vmand %vm1685, %vm1250
        %vm1702 = vmand %vm1686, %vm1251
        %vm1703 = vmand %vm1687, %vm1252
        %vm1704 = vmand %vm1688, %vm1253
        %vm1705 = vmand %vm1689, %vm1254
        %vm1706 = vmand %vm1690, %vm1255
        %vm1707 = vmand %vm1691, %vm1256
        %v1708 = vsel %vm1692, 1.0, 0.0
        %v1709 = vsel %vm1693, 1.0, 0.0
        %v1710 = vsel %vm1694, 1.0, 0.0
        %v1711 = vsel %vm1695, 1.0, 0.0
        %v1712 = vsel %vm1696, 1.0, 0.0
        %v1713 = vsel %vm1697, 1.0, 0.0
        %v1714 = vsel %vm1698, 1.0, 0.0
        %v1715 = vsel %vm1699, 1.0, 0.0
        %v1716 = vsel %vm1700, 1.0, 0.0
        %v1717 = vsel %vm1701, 1.0, 0.0
        %v1718 = vsel %vm1702, 1.0, 0.0
        %v1719 = vsel %vm1703, 1.0, 0.0
        %v1720 = vsel %vm1704, 1.0, 0.0
        %v1721 = vsel %vm1705, 1.0, 0.0
        %v1722 = vsel %vm1706, 1.0, 0.0
        %v1723 = vsel %vm1707, 1.0, 0.0
        %1725 = vset.pattern.permute.xlu0 1
        %1726 = vperm.xlu0 %1725, %v1169
        %v1727 = vpop.permute.xlu0 %1726
        %1730 = vset.pattern.permute.xlu0 1
        %1731 = vperm.xlu0 %1730, %v1170
        %v1732 = vpop.permute.xlu0 %1731
        %1735 = vset.pattern.permute.xlu0 1
        %1736 = vperm.xlu0 %1735, %v1171
        %v1737 = vpop.permute.xlu0 %1736
        %1740 = vset.pattern.permute.xlu0 1
        %1741 = vperm.xlu0 %1740, %v1172
        %v1742 = vpop.permute.xlu0 %1741
        %1745 = vset.pattern.permute.xlu0 1
        %1746 = vperm.xlu0 %1745, %v1173
        %v1747 = vpop.permute.xlu0 %1746
        %1750 = vset.pattern.permute.xlu0 1
        %1751 = vperm.xlu0 %1750, %v1174
        %v1752 = vpop.permute.xlu0 %1751
        %1755 = vset.pattern.permute.xlu0 1
        %1756 = vperm.xlu0 %1755, %v1175
        %v1757 = vpop.permute.xlu0 %1756
        %1760 = vset.pattern.permute.xlu0 1
        %1761 = vperm.xlu0 %1760, %v1176
        %v1762 = vpop.permute.xlu0 %1761
        %1765 = vset.pattern.permute.xlu0 1
        %1766 = vperm.xlu0 %1765, %v1177
        %v1767 = vpop.permute.xlu0 %1766
        %1770 = vset.pattern.permute.xlu0 1
        %1771 = vperm.xlu0 %1770, %v1178
        %v1772 = vpop.permute.xlu0 %1771
        %1775 = vset.pattern.permute.xlu0 1
        %1776 = vperm.xlu0 %1775, %v1179
        %v1777 = vpop.permute.xlu0 %1776
        %1780 = vset.pattern.permute.xlu0 1
        %1781 = vperm.xlu0 %1780, %v1180
        %v1782 = vpop.permute.xlu0 %1781
        %1785 = vset.pattern.permute.xlu0 1
        %1786 = vperm.xlu0 %1785, %v1181
        %v1787 = vpop.permute.xlu0 %1786
        %1790 = vset.pattern.permute.xlu0 1
        %1791 = vperm.xlu0 %1790, %v1182
        %v1792 = vpop.permute.xlu0 %1791
        %1795 = vset.pattern.permute.xlu0 1
        %1796 = vperm.xlu0 %1795, %v1183
        %v1797 = vpop.permute.xlu0 %1796
        %1800 = vset.pattern.permute.xlu0 1
        %1801 = vperm.xlu0 %1800, %v1184
        %v1802 = vpop.permute.xlu0 %1801
        %v1804 = vmul.f32 %v1708, %v1727
        %v1805 = vmul.f32 %v1709, %v1732
        %v1806 = vmul.f32 %v1710, %v1737
        %v1807 = vmul.f32 %v1711, %v1742
        %v1808 = vmul.f32 %v1712, %v1747
        %v1809 = vmul.f32 %v1713, %v1752
        %v1810 = vmul.f32 %v1714, %v1757
        %v1811 = vmul.f32 %v1715, %v1762
        %v1812 = vmul.f32 %v1716, %v1767
        %v1813 = vmul.f32 %v1717, %v1772
        %v1814 = vmul.f32 %v1718, %v1777
        %v1815 = vmul.f32 %v1719, %v1782
        %v1816 = vmul.f32 %v1720, %v1787
        %v1817 = vmul.f32 %v1721, %v1792
        %v1818 = vmul.f32 %v1722, %v1797
        %v1819 = vmul.f32 %v1723, %v1802
        %v1820 = vadd.f32 %v1804, %v1805
        %v1821 = vadd.f32 %v1820, %v1806
        %v1822 = vadd.f32 %v1821, %v1807
        %v1823 = vadd.f32 %v1822, %v1808
        %v1824 = vadd.f32 %v1823, %v1809
        %v1825 = vadd.f32 %v1824, %v1810
        %v1826 = vadd.f32 %v1825, %v1811
        %v1827 = vadd.f32 %v1826, %v1812
        %v1828 = vadd.f32 %v1827, %v1813
        %v1829 = vadd.f32 %v1828, %v1814
        %v1830 = vadd.f32 %v1829, %v1815
        %v1831 = vadd.f32 %v1830, %v1816
        %v1832 = vadd.f32 %v1831, %v1817
        %v1833 = vadd.f32 %v1832, %v1818
        %v1834 = vadd.f32 %v1833, %v1819
        %v1835 = vrot.slane %v1834, 4
        %v1836 = vadd.f32 %v1834, %v1835
        %v1837 = vrot.slane %v1836, 2
        %v1838 = vadd.f32 %v1836, %v1837
        %v1839 = vrot.slane %v1838, 1
        %v1840 = vadd.f32 %v1838, %v1839
        %v1841 = vmul.f32 %v1840, %v320
        %v1842 = vld [vmem:[%s230] sm:$0x3]
        %v1844 = vrot.slane %v1543, 1
        %vm1846 = vcmask 1040384
        %v1847 = vsel %vm1846, %v1844, %v1841
        %v1848 = vadd.f32 %v1842, %v1847
        %1849 = vst [vmem:[%s230] sm:$0x3] %v1848
        %s1850 = sand.u32 %s124, 1
        %s1851 = scalar_lea.sflag [#allocation3], %s1850
        %s1852 = sand.u32 %s124, 1
        %s1853 = smul.addr %s1852, 2
        %s1854 = scalar_lea.vmem [#allocation5], %s1853
        // Predicated region
        $region41: #{tpu_custom_call.1} parent=31 // pred_check
          %p1855 = pneg %p134
        $region42: #{tpu_custom_call.1} parent=31 // pred_check_branch
          %1857 = sbr.rel (%p1855) target = $region44
        $region43: #{tpu_custom_call.1} parent=31 // pred_region
          %s1858 = sadd.s32 %s23, %s24
          %s1860 = ssub.s32 32, 32
          %1861 = vsyncadd %s1851, %s1860
          %s1862 = smul.addr %s1858, 32
          %s1863 = scalar_lea.hbm %s3, %s1862
          %s1865 = sshll.u32 %s1854, 4
          %s1866 = int_to_ptr.vmem [resolvable:$true] %s1865
          %1868 = dma.vmem_to_hbm [thread:$0]  %s1866, 32, %s1863, %s1851
        $region44: #{tpu_custom_call.1} parent=31 // pred_fallthru
          _
      $region32: #{tpu_custom_call.1} parent=5 // pred_fallthru
        _
      %p1869 = scmp.le.s32.totalorder 2, %s13
      // Predicated region
      $region45: #{tpu_custom_call.1} parent=5 // pred_check
        %p1870 = pneg %p1869
      $region46: #{tpu_custom_call.1} parent=5 // pred_check_branch
        %1872 = sbr.rel (%p1870) target = $region48
      $region47: #{tpu_custom_call.1} parent=5 // pred_region
        %s1873 = ssub.s32 %s13, 2
        // Predicated region
        $region49: #{tpu_custom_call.1} parent=47 // pred_check
          %p1874 = pneg %p140
        $region50: #{tpu_custom_call.1} parent=47 // pred_check_branch
          %1876 = sbr.rel (%p1874) target = $region52
        $region51: #{tpu_custom_call.1} parent=47 // pred_region
          %s1877 = sand.u32 %s125, 1
          %s1878 = scalar_lea.sflag [#allocation3], %s1877
          %s1879 = sand.u32 %s125, 1
          %s1880 = smul.addr %s1879, 2
          %s1881 = scalar_lea.vmem [#allocation5], %s1880
          %1882 = dma.done %s1878, 32
        $region52: #{tpu_custom_call.1} parent=47 // pred_fallthru
          _
      $region48: #{tpu_custom_call.1} parent=5 // pred_fallthru
        _
    $region6: #{tpu_custom_call.1} parent=1 // loop_footer
      %s17 = sadd.s32 1, %s13
    $region7: #{tpu_custom_call.1} parent=1 // loop_footer_branch
      %12 = sbr.rel target = $region3
    $region8: #{tpu_custom_call.1} parent=1 // loop_exit
      _
    %1883 = vsyncpa [#allocation3], 1
    %s1884 = scalar_lea.sflag [#allocation3], 1
    %1885 = vsyncpa %s1884, 1
    %1886 = vsyncpa [#allocation4], 1
    %s1887 = scalar_lea.sflag [#allocation4], 1
    %1888 = vsyncpa %s1887, 1

</llo_original>
